<compile_context>
chip_gen: v7x
topology: tpu7x:2x2x1
jax: 0.10.0
libtpu: 0.0.40
codegen_flags: <defaults>
</compile_context>

<pallas_src>
import jax
import jax.numpy as jnp
from jax.experimental import pallas as pl
from jax.experimental.pallas import tpu as pltpu


def _round_up(n, m):
    return ((n + m - 1) // m) * m


def _make_kernel(has_action):
    def kernel(*refs):
        if has_action:
            (x_ref, w1_ref, b1_ref, w2_ref, b2_ref, w3_ref, b3_ref,
             g_ref, a_ref, out_ref) = refs
        else:
            (x_ref, w1_ref, b1_ref, w2_ref, b2_ref, w3_ref, b3_ref,
             g_ref, out_ref) = refs
            a_ref = None

        # ---- MLP (transposed: batch on lanes). bf16 operands on the MXU for the
        # first two layers, f32 for the final layer; f32 accumulation throughout. ----
        xT = x_ref[...]                                                     # [IN, TB] bf16
        h = jnp.tanh(jnp.dot(w1_ref[...], xT,
                             preferred_element_type=jnp.float32) + b1_ref[...])  # [H1, TB]
        h = jnp.tanh(jnp.dot(w2_ref[...], h.astype(jnp.bfloat16),
                             preferred_element_type=jnp.float32) + b2_ref[...])  # [H2, TB]
        logits = (jnp.dot(w3_ref[...], h,
                          preferred_element_type=jnp.float32) + b3_ref[...])     # [A, TB] f32

        # ---- numerically stable log-softmax over the action (sublane) axis ----
        m = jnp.max(logits, axis=0, keepdims=True)
        z = logits - m
        lse = jnp.log(jnp.sum(jnp.exp(z), axis=0, keepdims=True))
        logsm = z - lse                                                     # [A, TB]

        # ---- sample: Gumbel-max argmax over the action axis (noise from wrapper) ----
        act_dim = logits.shape[0]
        perturbed = logits + g_ref[...]                                     # [A, TB]
        row = jax.lax.broadcasted_iota(jnp.int32, logits.shape, 0)
        pmax = jnp.max(perturbed, axis=0, keepdims=True)
        pi = jnp.min(jnp.where(perturbed == pmax, row, act_dim),
                     axis=0, keepdims=True)                                 # [1, TB] int32

        # ---- log-probs via one-hot masked sublane reductions ----
        logp_pi = jnp.sum(jnp.where(row == pi, logsm, 0.0), axis=0, keepdims=True)

        out_ref[0:1, :] = pi.astype(jnp.float32)
        out_ref[1:2, :] = logp_pi
        if has_action:
            a = a_ref[...]                                                  # [1, TB] int32
            logp = jnp.sum(jnp.where(row == a, logsm, 0.0), axis=0, keepdims=True)
            out_ref[2:3, :] = logp

    return kernel


def categorical_policy_forward(x, params, seed, a=None, *, tb=1024):
    """x: [B, in_features] f32.  params: ((w1,b1),(w2,b2),(w3,b3)), w:[in,out], b:[1,out].
    seed: int scalar for the Gumbel noise.  a: optional [B] int actions.

    Returns (pi, logp, logp_pi) with shapes ([B], [B] or None, [B]), matching
    CategoricalPolicy.forward (logp is None when a is None).
    """
    (w1, b1), (w2, b2), (w3, b3) = params
    B, in_dim = x.shape
    act_dim = w3.shape[1]
    has_action = a is not None
    n_rows = 3 if has_action else 2

    # ---- batch tiling: batch on the lane axis, tile a multiple of 128; aim for an
    # even number (>=2) of grid steps so v7x's two TensorCores split the grid. ----
    b_min = _round_up(B, 128)
    if b_min <= 128:
        tile = b_min
        b_pad = b_min
    else:
        tile = max(128, min(_round_up(tb, 128), _round_up(b_min // 2, 128)))
        b_pad = _round_up(b_min, 2 * tile)
    steps = b_pad // tile
    # VMEM @ tile=1024: x^T 32 KiB (bf16) + gumbel 32 KiB + a 4 KiB + out 12 KiB,
    # x2 double-buffered, + ~20 KiB resident weights  ->  well under any scoped limit.

    # ---- transposed, lane-dense operands (padded rows are sliced off afterwards) ----
    xT = jnp.pad(x.T.astype(jnp.bfloat16), ((0, 0), (0, b_pad - B)))        # [IN, b_pad]
    w1t = w1.T.astype(jnp.bfloat16)                                         # [H1, IN]
    w2t = w2.T.astype(jnp.bfloat16)                                         # [H2, H1]
    w3t = w3.T.astype(jnp.float32)                                          # [A,  H2]  (f32)
    b1t = b1.reshape(-1, 1).astype(jnp.float32)                             # [H1, 1]
    b2t = b2.reshape(-1, 1).astype(jnp.float32)                             # [H2, 1]
    b3t = b3.reshape(-1, 1).astype(jnp.float32)                             # [A,  1]

    # Gumbel noise for Categorical sampling (generated as a regular JAX op).
    g = jax.random.gumbel(jax.random.PRNGKey(seed), (act_dim, b_pad), jnp.float32)

    lane_tiled = lambda i: (0, i)    # batch-tiled along the lane axis
    resident = lambda i: (0, 0)      # constant block index -> stays resident in VMEM

    in_specs = [
        pl.BlockSpec((in_dim, tile), lane_tiled),    # x^T
        pl.BlockSpec(w1t.shape, resident),
        pl.BlockSpec(b1t.shape, resident),
        pl.BlockSpec(w2t.shape, resident),
        pl.BlockSpec(b2t.shape, resident),
        pl.BlockSpec(w3t.shape, resident),
        pl.BlockSpec(b3t.shape, resident),
        pl.BlockSpec((act_dim, tile), lane_tiled),   # Gumbel noise
    ]
    operands = [xT, w1t, b1t, w2t, b2t, w3t, b3t, g]
    if has_action:
        a_in = jnp.pad(a.astype(jnp.int32), (0, b_pad - B)).reshape(1, b_pad)
        in_specs.append(pl.BlockSpec((1, tile), lane_tiled))
        operands.append(a_in)

    out = pl.pallas_call(
        _make_kernel(has_action),
        out_shape=jax.ShapeDtypeStruct((n_rows, b_pad), jnp.float32),
        grid=(steps,),
        in_specs=in_specs,
        out_specs=pl.BlockSpec((n_rows, tile), lane_tiled),
        compiler_params=pltpu.CompilerParams(
            dimension_semantics=("parallel",)),       # dual-TC on v7x; no-op on v5e/v6e
    )(*operands)

    pi = out[0, :B].astype(jnp.int32)
    logp_pi = out[1, :B]
    logp = out[2, :B] if has_action else None
    return pi, logp, logp_pi


def init_linear(key, fan_in, fan_out):
    # matches torch.nn.Linear default init: U(-1/sqrt(fan_in), 1/sqrt(fan_in))
    kw, kb = jax.random.split(key)
    bound = 1.0 / float(fan_in) ** 0.5
    w = jax.random.uniform(kw, (fan_in, fan_out), jnp.float32, -bound, bound)
    b = jax.random.uniform(kb, (1, fan_out), jnp.float32, -bound, bound)
    return w, b


def _reference_logp(x, params, a):
    (w1, b1), (w2, b2), (w3, b3) = params
    h = jnp.tanh(x @ w1 + b1)
    h = jnp.tanh(h @ w2 + b2)
    logits = h @ w3 + b3
    logsm = jax.nn.log_softmax(logits, axis=-1)
    return jnp.take_along_axis(logsm, a[:, None], axis=-1)[:, 0]


if __name__ == "__main__":
    # CategoricalPolicy(in_features=16, hidden_sizes=(64, 64), ..., action_dim=8)
    B, IN, H1, H2, A = 1000, 16, 64, 64, 8   # B=1000 exercises the ragged-tail padding

    key = jax.random.PRNGKey(0)
    kx, k1, k2, k3, ka = jax.random.split(key, 5)

    x = jax.random.normal(kx, (B, IN), jnp.float32)
    params = (
        init_linear(k1, IN, H1),
        init_linear(k2, H1, H2),
        init_linear(k3, H2, A),
    )
    a = jax.random.randint(ka, (B,), 0, A, jnp.int32)

    # with actions (pi, logp(a), logp(pi))
    pi, logp, logp_pi = categorical_policy_forward(x, params, seed=1234, a=a)
    jax.block_until_ready((pi, logp, logp_pi))

    # sample-only path (a=None -> logp is None, no `a` DMA / reduction)
    pi2, logp2, logp_pi2 = categorical_policy_forward(x, params, seed=7, a=None)
    jax.block_until_ready((pi2, logp_pi2))

    # sanity: shapes, ranges, and logp(a) against a pure-JAX f32 reference
    assert pi.shape == (B,) and logp.shape == (B,) and logp_pi.shape == (B,)
    assert logp2 is None and pi2.shape == (B,) and logp_pi2.shape == (B,)
    assert bool(jnp.all((pi >= 0) & (pi < A))) and bool(jnp.all((pi2 >= 0) & (pi2 < A)))
    assert bool(jnp.all(logp <= 0.0)) and bool(jnp.all(logp_pi <= 0.0))
    ref = _reference_logp(x, params, a)
    assert bool(jnp.max(jnp.abs(logp - ref)) < 5e-2), "logp mismatch vs f32 reference"

    print("KERNEL_OK")
</pallas_src>

<mosaic_0001>
module attributes {stable_mosaic.version = 11 : i64} {
  func.func @kernel(%arg0: i32, %arg1: memref<16x512xbf16, #tpu.memory_space<vmem>>, %arg2: memref<64x16xbf16, #tpu.memory_space<vmem>>, %arg3: memref<64x1xf32, #tpu.memory_space<vmem>>, %arg4: memref<64x64xbf16, #tpu.memory_space<vmem>>, %arg5: memref<64x1xf32, #tpu.memory_space<vmem>>, %arg6: memref<8x64xf32, #tpu.memory_space<vmem>>, %arg7: memref<8x1xf32, #tpu.memory_space<vmem>>, %arg8: memref<8x512xf32, #tpu.memory_space<vmem>>, %arg9: memref<1x512xi32, #tpu.memory_space<vmem>>, %arg10: memref<3x512xf32, #tpu.memory_space<vmem>>) attributes {dimension_semantics = [#tpu.dimension_semantics<parallel>], iteration_bounds = array<i64: 2>, scalar_prefetch = 0 : i64, scratch_operands = 0 : i64, tpu.core_type = #tpu.core_type<tc>, window_params = [{transform_indices = @transform_0, window_bounds = array<i64: 16, 512>}, {pipeline_mode = #tpu.pipeline_mode<synchronous>, transform_indices = @transform_1, window_bounds = array<i64: 64, 16>}, {pipeline_mode = #tpu.pipeline_mode<synchronous>, transform_indices = @transform_2, window_bounds = array<i64: 64, 1>}, {pipeline_mode = #tpu.pipeline_mode<synchronous>, transform_indices = @transform_3, window_bounds = array<i64: 64, 64>}, {pipeline_mode = #tpu.pipeline_mode<synchronous>, transform_indices = @transform_4, window_bounds = array<i64: 64, 1>}, {pipeline_mode = #tpu.pipeline_mode<synchronous>, transform_indices = @transform_5, window_bounds = array<i64: 8, 64>}, {pipeline_mode = #tpu.pipeline_mode<synchronous>, transform_indices = @transform_6, window_bounds = array<i64: 8, 1>}, {transform_indices = @transform_7, window_bounds = array<i64: 8, 512>}, {transform_indices = @transform_8, window_bounds = array<i64: 1, 512>}, {transform_indices = @transform_9, window_bounds = array<i64: 3, 512>}]} {
    %c0 = arith.constant 0 : index
    %c0_0 = arith.constant 0 : index
    %0 = vector.load %arg1[%c0, %c0_0] : memref<16x512xbf16, #tpu.memory_space<vmem>>, vector<16x512xbf16>
    %c0_1 = arith.constant 0 : index
    %c0_2 = arith.constant 0 : index
    %1 = vector.load %arg2[%c0_1, %c0_2] : memref<64x16xbf16, #tpu.memory_space<vmem>>, vector<64x16xbf16>
    %cst = arith.constant dense<0.000000e+00> : vector<64x512xf32>
    %2 = tpu.matmul %1, %0, %cst {dimension_numbers = #tpu.dot_dimension_numbers<[1], [0], [0], [1], [0, 0, 1, 1], [], []>} : vector<64x16xbf16>, vector<16x512xbf16>, vector<64x512xf32> -> vector<64x512xf32>
    %c0_3 = arith.constant 0 : index
    %c0_4 = arith.constant 0 : index
    %3 = vector.load %arg3[%c0_3, %c0_4] : memref<64x1xf32, #tpu.memory_space<vmem>>, vector<64x1xf32>
    %4 = vector.broadcast %3 : vector<64x1xf32> to vector<64x512xf32>
    %5 = arith.addf %2, %4 : vector<64x512xf32>
    %6 = math.tanh %5 : vector<64x512xf32>
    %c0_5 = arith.constant 0 : index
    %c0_6 = arith.constant 0 : index
    %7 = vector.load %arg4[%c0_5, %c0_6] : memref<64x64xbf16, #tpu.memory_space<vmem>>, vector<64x64xbf16>
    %8 = arith.truncf %6 : vector<64x512xf32> to vector<64x512xbf16>
    %cst_7 = arith.constant dense<0.000000e+00> : vector<64x512xf32>
    %9 = tpu.matmul %7, %8, %cst_7 {dimension_numbers = #tpu.dot_dimension_numbers<[1], [0], [0], [1], [0, 0, 1, 1], [], []>} : vector<64x64xbf16>, vector<64x512xbf16>, vector<64x512xf32> -> vector<64x512xf32>
    %c0_8 = arith.constant 0 : index
    %c0_9 = arith.constant 0 : index
    %10 = vector.load %arg5[%c0_8, %c0_9] : memref<64x1xf32, #tpu.memory_space<vmem>>, vector<64x1xf32>
    %11 = vector.broadcast %10 : vector<64x1xf32> to vector<64x512xf32>
    %12 = arith.addf %9, %11 : vector<64x512xf32>
    %13 = math.tanh %12 : vector<64x512xf32>
    %c0_10 = arith.constant 0 : index
    %c0_11 = arith.constant 0 : index
    %14 = vector.load %arg6[%c0_10, %c0_11] : memref<8x64xf32, #tpu.memory_space<vmem>>, vector<8x64xf32>
    %cst_12 = arith.constant dense<0.000000e+00> : vector<8x512xf32>
    %15 = tpu.matmul %14, %13, %cst_12 {dimension_numbers = #tpu.dot_dimension_numbers<[1], [0], [0], [1], [0, 0, 1, 1], [], []>} : vector<8x64xf32>, vector<64x512xf32>, vector<8x512xf32> -> vector<8x512xf32>
    %c0_13 = arith.constant 0 : index
    %c0_14 = arith.constant 0 : index
    %16 = vector.load %arg7[%c0_13, %c0_14] : memref<8x1xf32, #tpu.memory_space<vmem>>, vector<8x1xf32>
    %17 = vector.broadcast %16 : vector<8x1xf32> to vector<8x512xf32>
    %18 = arith.addf %15, %17 : vector<8x512xf32>
    %cst_15 = arith.constant dense<0xFF800000> : vector<512xf32>
    %19 = vector.multi_reduction <maximumf>, %18, %cst_15 [0] : vector<8x512xf32> to vector<512xf32>
    %20 = vector.shape_cast %19 : vector<512xf32> to vector<1x512xf32>
    %21 = vector.broadcast %20 : vector<1x512xf32> to vector<8x512xf32>
    %22 = arith.subf %18, %21 : vector<8x512xf32>
    %23 = math.exp %22 : vector<8x512xf32>
    %cst_16 = arith.constant dense<0.000000e+00> : vector<512xf32>
    %24 = vector.multi_reduction <add>, %23, %cst_16 [0] : vector<8x512xf32> to vector<512xf32>
    %25 = vector.shape_cast %24 : vector<512xf32> to vector<1x512xf32>
    %26 = math.log %25 : vector<1x512xf32>
    %27 = vector.broadcast %26 : vector<1x512xf32> to vector<8x512xf32>
    %28 = arith.subf %22, %27 : vector<8x512xf32>
    %c0_17 = arith.constant 0 : index
    %c0_18 = arith.constant 0 : index
    %29 = vector.load %arg8[%c0_17, %c0_18] : memref<8x512xf32, #tpu.memory_space<vmem>>, vector<8x512xf32>
    %30 = arith.addf %18, %29 : vector<8x512xf32>
    %31 = tpu.iota {dimensions = array<i32: 0>} : vector<8x512xi32>
    %cst_19 = arith.constant dense<0xFF800000> : vector<512xf32>
    %32 = vector.multi_reduction <maximumf>, %30, %cst_19 [0] : vector<8x512xf32> to vector<512xf32>
    %33 = vector.shape_cast %32 : vector<512xf32> to vector<1x512xf32>
    %34 = vector.broadcast %33 : vector<1x512xf32> to vector<8x512xf32>
    %35 = arith.cmpf oeq, %30, %34 : vector<8x512xf32>
    %c8_i32 = arith.constant 8 : i32
    %36 = vector.broadcast %c8_i32 : i32 to vector<8x512xi32>
    %37 = arith.select %35, %31, %36 : vector<8x512xi1>, vector<8x512xi32>
    %cst_20 = arith.constant dense<2147483647> : vector<512xi32>
    %38 = vector.multi_reduction <minsi>, %37, %cst_20 [0] : vector<8x512xi32> to vector<512xi32>
    %39 = vector.shape_cast %38 : vector<512xi32> to vector<1x512xi32>
    %40 = vector.broadcast %39 : vector<1x512xi32> to vector<8x512xi32>
    %41 = arith.cmpi eq, %31, %40 : vector<8x512xi32>
    %cst_21 = arith.constant 0.000000e+00 : f32
    %42 = vector.broadcast %cst_21 : f32 to vector<8x512xf32>
    %43 = arith.select %41, %28, %42 : vector<8x512xi1>, vector<8x512xf32>
    %cst_22 = arith.constant dense<0.000000e+00> : vector<512xf32>
    %44 = vector.multi_reduction <add>, %43, %cst_22 [0] : vector<8x512xf32> to vector<512xf32>
    %45 = vector.shape_cast %44 : vector<512xf32> to vector<1x512xf32>
    %46 = arith.sitofp %39 : vector<1x512xi32> to vector<1x512xf32>
    %c0_23 = arith.constant 0 : index
    %c0_24 = arith.constant 0 : index
    %47 = vector.load %arg10[%c0_23, %c0_24] : memref<3x512xf32, #tpu.memory_space<vmem>>, vector<1x512xf32>
    tpu.vector_store %arg10[%c0_23, %c0_24], %46 {strides = array<i32>} : memref<3x512xf32, #tpu.memory_space<vmem>>, vector<1x512xf32>,
    %c1 = arith.constant 1 : index
    %c0_25 = arith.constant 0 : index
    %48 = vector.load %arg10[%c1, %c0_25] : memref<3x512xf32, #tpu.memory_space<vmem>>, vector<1x512xf32>
    tpu.vector_store %arg10[%c1, %c0_25], %45 {strides = array<i32>} : memref<3x512xf32, #tpu.memory_space<vmem>>, vector<1x512xf32>,
    %c0_26 = arith.constant 0 : index
    %c0_27 = arith.constant 0 : index
    %49 = vector.load %arg9[%c0_26, %c0_27] : memref<1x512xi32, #tpu.memory_space<vmem>>, vector<1x512xi32>
    %50 = vector.broadcast %49 : vector<1x512xi32> to vector<8x512xi32>
    %51 = arith.cmpi eq, %31, %50 : vector<8x512xi32>
    %cst_28 = arith.constant 0.000000e+00 : f32
    %52 = vector.broadcast %cst_28 : f32 to vector<8x512xf32>
    %53 = arith.select %51, %28, %52 : vector<8x512xi1>, vector<8x512xf32>
    %cst_29 = arith.constant dense<0.000000e+00> : vector<512xf32>
    %54 = vector.multi_reduction <add>, %53, %cst_29 [0] : vector<8x512xf32> to vector<512xf32>
    %55 = vector.shape_cast %54 : vector<512xf32> to vector<1x512xf32>
    %c2 = arith.constant 2 : index
    %c0_30 = arith.constant 0 : index
    %56 = vector.load %arg10[%c2, %c0_30] : memref<3x512xf32, #tpu.memory_space<vmem>>, vector<1x512xf32>
    tpu.vector_store %arg10[%c2, %c0_30], %55 {strides = array<i32>} : memref<3x512xf32, #tpu.memory_space<vmem>>, vector<1x512xf32>,
    return
  }
  func.func @transform_0(%arg0: i32) -> (i32, i32) {
    %c0_i32 = arith.constant 0 : i32
    %c0_i32_0 = arith.constant 0 : i32
    return %c0_i32, %arg0 : i32, i32
  }
  func.func @transform_1(%arg0: i32) -> (i32, i32) {
    %c0_i32 = arith.constant 0 : i32
    %c0_i32_0 = arith.constant 0 : i32
    %c0_i32_1 = arith.constant 0 : i32
    return %c0_i32, %c0_i32_0 : i32, i32
  }
  func.func @transform_2(%arg0: i32) -> (i32, i32) {
    %c0_i32 = arith.constant 0 : i32
    %c0_i32_0 = arith.constant 0 : i32
    %c0_i32_1 = arith.constant 0 : i32
    return %c0_i32, %c0_i32_0 : i32, i32
  }
  func.func @transform_3(%arg0: i32) -> (i32, i32) {
    %c0_i32 = arith.constant 0 : i32
    %c0_i32_0 = arith.constant 0 : i32
    %c0_i32_1 = arith.constant 0 : i32
    return %c0_i32, %c0_i32_0 : i32, i32
  }
  func.func @transform_4(%arg0: i32) -> (i32, i32) {
    %c0_i32 = arith.constant 0 : i32
    %c0_i32_0 = arith.constant 0 : i32
    %c0_i32_1 = arith.constant 0 : i32
    return %c0_i32, %c0_i32_0 : i32, i32
  }
  func.func @transform_5(%arg0: i32) -> (i32, i32) {
    %c0_i32 = arith.constant 0 : i32
    %c0_i32_0 = arith.constant 0 : i32
    %c0_i32_1 = arith.constant 0 : i32
    return %c0_i32, %c0_i32_0 : i32, i32
  }
  func.func @transform_6(%arg0: i32) -> (i32, i32) {
    %c0_i32 = arith.constant 0 : i32
    %c0_i32_0 = arith.constant 0 : i32
    %c0_i32_1 = arith.constant 0 : i32
    return %c0_i32, %c0_i32_0 : i32, i32
  }
  func.func @transform_7(%arg0: i32) -> (i32, i32) {
    %c0_i32 = arith.constant 0 : i32
    %c0_i32_0 = arith.constant 0 : i32
    return %c0_i32, %arg0 : i32, i32
  }
  func.func @transform_8(%arg0: i32) -> (i32, i32) {
    %c0_i32 = arith.constant 0 : i32
    %c0_i32_0 = arith.constant 0 : i32
    return %c0_i32, %arg0 : i32, i32
  }
  func.func @transform_9(%arg0: i32) -> (i32, i32) {
    %c0_i32 = arith.constant 0 : i32
    %c0_i32_0 = arith.constant 0 : i32
    return %c0_i32, %arg0 : i32, i32
  }
}

</mosaic_0001>

<llo_original>
// kernel: tpu_custom_call.1
$region0: #{tpu_custom_call.1}
  #allocation0 [shape = 'u32[]', space=smem, size = 0x4, offset = 0x4, fixed_abs, tag = 'smem constant byte address 0x4 - core index']
  #allocation1 [shape = 'u32[144,128]{1,0:T(1,128)}', space=vmem, size = 0x12000, scoped, tag = 'internal scratch']
  %s0 = inlined_call_operand.vmem [shape: bf16[16,1024], index: 0, kind: input, shape index: {}]
  %s1 = inlined_call_operand.vmem [shape: bf16[64,16], index: 1, kind: input, shape index: {}]
  %s2 = inlined_call_operand.vmem [shape: f32[64,1], index: 2, kind: input, shape index: {}]
  %s3 = inlined_call_operand.vmem [shape: bf16[64,64], index: 3, kind: input, shape index: {}]
  %s4 = inlined_call_operand.vmem [shape: f32[64,1], index: 4, kind: input, shape index: {}]
  %s5 = inlined_call_operand.vmem [shape: f32[8,64], index: 5, kind: input, shape index: {}]
  %s6 = inlined_call_operand.vmem [shape: f32[8,1], index: 6, kind: input, shape index: {}]
  %s7 = inlined_call_operand.vmem [shape: f32[8,1024], index: 7, kind: input, shape index: {}]
  %s8 = inlined_call_operand.vmem [shape: s32[1,1024], index: 8, kind: input, shape index: {}]
  %s9 = inlined_call_operand.hbm [shape: f32[3,1024], index: 9, kind: output, shape index: {}]
  %s10 = sld [smem:[#allocation0]]
  $region92: #{tpu_custom_call.1} parent=0
    _
  %s12 = ssub.s32 1, %s10
  %s13 = scalar_select 0, %s12, %s10
  $region1: #{tpu_custom_call.1} parent=0
    #allocation2 [shape = 'u8[32768]{0}', space=vmem, size = 0x8000, scoped, tag = 'input window, operand 0']
    #allocation3 [shape = 'u8[16384]{0}', space=vmem, size = 0x4000, scoped, tag = 'output window, operand 0']
    #allocation4 [shape = 's32[2]{0}', space=sflag, size = 0x8, scoped, tag = 'scoped memory for tpu_custom_call.1']
    %14 = vsyncpa [#allocation4], 0
    %s15 = scalar_lea.sflag [#allocation4], 1
    %16 = vsyncpa %s15, 0
    loop: start=0, step=1, limit=4
    $region2: #{tpu_custom_call.1} parent=1 // loop_pre_header
      _
    $region3: #{tpu_custom_call.1} parent=1 // loop_header
      %s18 = sphi 0, %s22
      %p19 = scmp.ge.s32.totalorder %s18, 4
      %s28 = sphi 0, %s30
      %s31 = sphi 0, %s28
      %s32 = sphi 0, %s31
      %s48 = sphi 0, %s32
      %s52 = sphi 0, %s52
      %s54 = sphi 0, %s52
      %s55 = sphi 0, %s54
      %s69 = sphi 0, %s55
      %s73 = sphi 0, %s73
      %s75 = sphi 0, %s73
      %s76 = sphi 0, %s75
      %s90 = sphi 0, %s76
      %s94 = sphi 0, %s94
      %s96 = sphi 0, %s94
      %s97 = sphi 0, %s96
      %s111 = sphi 0, %s97
      %s115 = sphi 0, %s115
      %s117 = sphi 0, %s115
      %s118 = sphi 0, %s117
      %s132 = sphi 0, %s118
      %s136 = sphi 0, %s136
      %s138 = sphi 0, %s136
      %s139 = sphi 0, %s138
      %s153 = sphi 0, %s139
      %s157 = sphi 0, %s157
      %s159 = sphi 0, %s157
      %s160 = sphi 0, %s159
      %s174 = sphi 0, %s160
      %s180 = sphi 0, %s182
      %s183 = sphi 0, %s180
      %s184 = sphi 0, %s183
      %s200 = sphi 0, %s184
      %s206 = sphi 0, %s208
      %s209 = sphi 0, %s206
      %s210 = sphi 0, %s209
      %s226 = sphi 0, %s210
      %s232 = sphi 0, %s234
      %s235 = sphi 0, %s232
      %s236 = sphi 0, %s235
      %s252 = sphi 0, %s236
    $region4: #{tpu_custom_call.1} parent=1 // loop_header_branch
      %21 = sbr.rel (%p19) target = $region8
    $region5: #{tpu_custom_call.1} parent=1 // loop_body
      %s23 = ssub.s32 %s18, 1
      %s24 = ssub.s32 %s18, 2
      %s25 = sadd.s32 %s18, 1
      %s26 = ssub.s32 %s18, %s25
      %p27 = scmp.eq.s32.totalorder %s26, 0
      %s29 = sadd.s32 %s28, 1
      %s30 = scalar_select %p27, %s28, %s29
      %p33 = pneg %p27
      %p34 = scmp.eq.s32.totalorder %s18, 1
      %p35 = por %p33, %p34
      %p36 = scmp.ne.s32.totalorder %s28, %s31
      %p37 = scmp.eq.s32.totalorder %s18, 0
      %p38 = por %p36, %p37
      %p39 = scmp.ne.s32.totalorder %s28, %s31
      %p40 = scmp.eq.s32.totalorder %s23, 1
      %p41 = por %p39, %p40
      %p42 = scmp.ne.s32.totalorder %s31, %s32
      %p43 = scmp.eq.s32.totalorder %s23, 0
      %p44 = por %p42, %p43
      %p45 = scmp.ne.s32.totalorder %s31, %s32
      %p46 = scmp.eq.s32.totalorder %s24, 1
      %p47 = por %p45, %p46
      %p49 = scmp.ne.s32.totalorder %s32, %s48
      %p50 = scmp.eq.s32.totalorder %s24, 0
      %p51 = por %p49, %p50
      %s53 = sadd.s32 %s52, 1
      %p56 = scmp.eq.s32.totalorder %s18, 1
      %p57 = scmp.ne.s32.totalorder %s52, %s54
      %p58 = scmp.eq.s32.totalorder %s18, 0
      %p59 = por %p57, %p58
      %p60 = scmp.ne.s32.totalorder %s52, %s54
      %p61 = scmp.eq.s32.totalorder %s23, 1
      %p62 = por %p60, %p61
      %p63 = scmp.ne.s32.totalorder %s54, %s55
      %p64 = scmp.eq.s32.totalorder %s23, 0
      %p65 = por %p63, %p64
      %p66 = scmp.ne.s32.totalorder %s54, %s55
      %p67 = scmp.eq.s32.totalorder %s24, 1
      %p68 = por %p66, %p67
      %p70 = scmp.ne.s32.totalorder %s55, %s69
      %p71 = scmp.eq.s32.totalorder %s24, 0
      %p72 = por %p70, %p71
      %s74 = sadd.s32 %s73, 1
      %p77 = scmp.eq.s32.totalorder %s18, 1
      %p78 = scmp.ne.s32.totalorder %s73, %s75
      %p79 = scmp.eq.s32.totalorder %s18, 0
      %p80 = por %p78, %p79
      %p81 = scmp.ne.s32.totalorder %s73, %s75
      %p82 = scmp.eq.s32.totalorder %s23, 1
      %p83 = por %p81, %p82
      %p84 = scmp.ne.s32.totalorder %s75, %s76
      %p85 = scmp.eq.s32.totalorder %s23, 0
      %p86 = por %p84, %p85
      %p87 = scmp.ne.s32.totalorder %s75, %s76
      %p88 = scmp.eq.s32.totalorder %s24, 1
      %p89 = por %p87, %p88
      %p91 = scmp.ne.s32.totalorder %s76, %s90
      %p92 = scmp.eq.s32.totalorder %s24, 0
      %p93 = por %p91, %p92
      %s95 = sadd.s32 %s94, 1
      %p98 = scmp.eq.s32.totalorder %s18, 1
      %p99 = scmp.ne.s32.totalorder %s94, %s96
      %p100 = scmp.eq.s32.totalorder %s18, 0
      %p101 = por %p99, %p100
      %p102 = scmp.ne.s32.totalorder %s94, %s96
      %p103 = scmp.eq.s32.totalorder %s23, 1
      %p104 = por %p102, %p103
      %p105 = scmp.ne.s32.totalorder %s96, %s97
      %p106 = scmp.eq.s32.totalorder %s23, 0
      %p107 = por %p105, %p106
      %p108 = scmp.ne.s32.totalorder %s96, %s97
      %p109 = scmp.eq.s32.totalorder %s24, 1
      %p110 = por %p108, %p109
      %p112 = scmp.ne.s32.totalorder %s97, %s111
      %p113 = scmp.eq.s32.totalorder %s24, 0
      %p114 = por %p112, %p113
      %s116 = sadd.s32 %s115, 1
      %p119 = scmp.eq.s32.totalorder %s18, 1
      %p120 = scmp.ne.s32.totalorder %s115, %s117
      %p121 = scmp.eq.s32.totalorder %s18, 0
      %p122 = por %p120, %p121
      %p123 = scmp.ne.s32.totalorder %s115, %s117
      %p124 = scmp.eq.s32.totalorder %s23, 1
      %p125 = por %p123, %p124
      %p126 = scmp.ne.s32.totalorder %s117, %s118
      %p127 = scmp.eq.s32.totalorder %s23, 0
      %p128 = por %p126, %p127
      %p129 = scmp.ne.s32.totalorder %s117, %s118
      %p130 = scmp.eq.s32.totalorder %s24, 1
      %p131 = por %p129, %p130
      %p133 = scmp.ne.s32.totalorder %s118, %s132
      %p134 = scmp.eq.s32.totalorder %s24, 0
      %p135 = por %p133, %p134
      %s137 = sadd.s32 %s136, 1
      %p140 = scmp.eq.s32.totalorder %s18, 1
      %p141 = scmp.ne.s32.totalorder %s136, %s138
      %p142 = scmp.eq.s32.totalorder %s18, 0
      %p143 = por %p141, %p142
      %p144 = scmp.ne.s32.totalorder %s136, %s138
      %p145 = scmp.eq.s32.totalorder %s23, 1
      %p146 = por %p144, %p145
      %p147 = scmp.ne.s32.totalorder %s138, %s139
      %p148 = scmp.eq.s32.totalorder %s23, 0
      %p149 = por %p147, %p148
      %p150 = scmp.ne.s32.totalorder %s138, %s139
      %p151 = scmp.eq.s32.totalorder %s24, 1
      %p152 = por %p150, %p151
      %p154 = scmp.ne.s32.totalorder %s139, %s153
      %p155 = scmp.eq.s32.totalorder %s24, 0
      %p156 = por %p154, %p155
      %s158 = sadd.s32 %s157, 1
      %p161 = scmp.eq.s32.totalorder %s18, 1
      %p162 = scmp.ne.s32.totalorder %s157, %s159
      %p163 = scmp.eq.s32.totalorder %s18, 0
      %p164 = por %p162, %p163
      %p165 = scmp.ne.s32.totalorder %s157, %s159
      %p166 = scmp.eq.s32.totalorder %s23, 1
      %p167 = por %p165, %p166
      %p168 = scmp.ne.s32.totalorder %s159, %s160
      %p169 = scmp.eq.s32.totalorder %s23, 0
      %p170 = por %p168, %p169
      %p171 = scmp.ne.s32.totalorder %s159, %s160
      %p172 = scmp.eq.s32.totalorder %s24, 1
      %p173 = por %p171, %p172
      %p175 = scmp.ne.s32.totalorder %s160, %s174
      %p176 = scmp.eq.s32.totalorder %s24, 0
      %p177 = por %p175, %p176
      %s178 = ssub.s32 %s18, %s25
      %p179 = scmp.eq.s32.totalorder %s178, 0
      %s181 = sadd.s32 %s180, 1
      %s182 = scalar_select %p179, %s180, %s181
      %p185 = pneg %p179
      %p186 = scmp.eq.s32.totalorder %s18, 1
      %p187 = por %p185, %p186
      %p188 = scmp.ne.s32.totalorder %s180, %s183
      %p189 = scmp.eq.s32.totalorder %s18, 0
      %p190 = por %p188, %p189
      %p191 = scmp.ne.s32.totalorder %s180, %s183
      %p192 = scmp.eq.s32.totalorder %s23, 1
      %p193 = por %p191, %p192
      %p194 = scmp.ne.s32.totalorder %s183, %s184
      %p195 = scmp.eq.s32.totalorder %s23, 0
      %p196 = por %p194, %p195
      %p197 = scmp.ne.s32.totalorder %s183, %s184
      %p198 = scmp.eq.s32.totalorder %s24, 1
      %p199 = por %p197, %p198
      %p201 = scmp.ne.s32.totalorder %s184, %s200
      %p202 = scmp.eq.s32.totalorder %s24, 0
      %p203 = por %p201, %p202
      %s204 = ssub.s32 %s18, %s25
      %p205 = scmp.eq.s32.totalorder %s204, 0
      %s207 = sadd.s32 %s206, 1
      %s208 = scalar_select %p205, %s206, %s207
      %p211 = pneg %p205
      %p212 = scmp.eq.s32.totalorder %s18, 1
      %p213 = por %p211, %p212
      %p214 = scmp.ne.s32.totalorder %s206, %s209
      %p215 = scmp.eq.s32.totalorder %s18, 0
      %p216 = por %p214, %p215
      %p217 = scmp.ne.s32.totalorder %s206, %s209
      %p218 = scmp.eq.s32.totalorder %s23, 1
      %p219 = por %p217, %p218
      %p220 = scmp.ne.s32.totalorder %s209, %s210
      %p221 = scmp.eq.s32.totalorder %s23, 0
      %p222 = por %p220, %p221
      %p223 = scmp.ne.s32.totalorder %s209, %s210
      %p224 = scmp.eq.s32.totalorder %s24, 1
      %p225 = por %p223, %p224
      %p227 = scmp.ne.s32.totalorder %s210, %s226
      %p228 = scmp.eq.s32.totalorder %s24, 0
      %p229 = por %p227, %p228
      %s230 = ssub.s32 %s18, %s25
      %p231 = scmp.eq.s32.totalorder %s230, 0
      %s233 = sadd.s32 %s232, 1
      %s234 = scalar_select %p231, %s232, %s233
      %p237 = pneg %p231
      %p238 = scmp.eq.s32.totalorder %s18, 1
      %p239 = por %p237, %p238
      %p240 = scmp.ne.s32.totalorder %s232, %s235
      %p241 = scmp.eq.s32.totalorder %s18, 0
      %p242 = por %p240, %p241
      %p243 = scmp.ne.s32.totalorder %s232, %s235
      %p244 = scmp.eq.s32.totalorder %s23, 1
      %p245 = por %p243, %p244
      %p246 = scmp.ne.s32.totalorder %s235, %s236
      %p247 = scmp.eq.s32.totalorder %s23, 0
      %p248 = por %p246, %p247
      %p249 = scmp.ne.s32.totalorder %s235, %s236
      %p250 = scmp.eq.s32.totalorder %s24, 1
      %p251 = por %p249, %p250
      %p253 = scmp.ne.s32.totalorder %s236, %s252
      %p254 = scmp.eq.s32.totalorder %s24, 0
      %p255 = por %p253, %p254
      %p256 = scmp.le.s32.totalorder 1, %s18
      %p257 = scmp.lt.s32.totalorder %s18, 3
      %p258 = pnand %p256, %p257
      %p259 = pneg %p258
      // Predicated region
      $region9: #{tpu_custom_call.1} parent=5 // pred_check
        _
      $region10: #{tpu_custom_call.1} parent=5 // pred_check_branch
        %261 = sbr.rel (%p258) target = $region12
      $region11: #{tpu_custom_call.1} parent=5 // pred_region
        %s262 = ssub.s32 %s18, 1
        // Predicated region
        $region13: #{tpu_custom_call.1} parent=11 // pred_check
          %p263 = pneg %p65
        $region14: #{tpu_custom_call.1} parent=11 // pred_check_branch
          %265 = sbr.rel (%p263) target = $region16
        $region15: #{tpu_custom_call.1} parent=11 // pred_region
          _
        $region16: #{tpu_custom_call.1} parent=11 // pred_fallthru
          _
        // Predicated region
        $region17: #{tpu_custom_call.1} parent=11 // pred_check
          %p266 = pneg %p86
        $region18: #{tpu_custom_call.1} parent=11 // pred_check_branch
          %268 = sbr.rel (%p266) target = $region20
        $region19: #{tpu_custom_call.1} parent=11 // pred_region
          _
        $region20: #{tpu_custom_call.1} parent=11 // pred_fallthru
          _
        // Predicated region
        $region21: #{tpu_custom_call.1} parent=11 // pred_check
          %p269 = pneg %p107
        $region22: #{tpu_custom_call.1} parent=11 // pred_check_branch
          %271 = sbr.rel (%p269) target = $region24
        $region23: #{tpu_custom_call.1} parent=11 // pred_region
          _
        $region24: #{tpu_custom_call.1} parent=11 // pred_fallthru
          _
        // Predicated region
        $region25: #{tpu_custom_call.1} parent=11 // pred_check
          %p272 = pneg %p128
        $region26: #{tpu_custom_call.1} parent=11 // pred_check_branch
          %274 = sbr.rel (%p272) target = $region28
        $region27: #{tpu_custom_call.1} parent=11 // pred_region
          _
        $region28: #{tpu_custom_call.1} parent=11 // pred_fallthru
          _
        // Predicated region
        $region29: #{tpu_custom_call.1} parent=11 // pred_check
          %p275 = pneg %p149
        $region30: #{tpu_custom_call.1} parent=11 // pred_check_branch
          %277 = sbr.rel (%p275) target = $region32
        $region31: #{tpu_custom_call.1} parent=11 // pred_region
          _
        $region32: #{tpu_custom_call.1} parent=11 // pred_fallthru
          _
        // Predicated region
        $region33: #{tpu_custom_call.1} parent=11 // pred_check
          %p278 = pneg %p170
        $region34: #{tpu_custom_call.1} parent=11 // pred_check_branch
          %280 = sbr.rel (%p278) target = $region36
        $region35: #{tpu_custom_call.1} parent=11 // pred_region
          _
        $region36: #{tpu_custom_call.1} parent=11 // pred_fallthru
          _
      $region12: #{tpu_custom_call.1} parent=5 // pred_fallthru
        _
      %p281 = scmp.lt.s32.totalorder %s18, 2
      // Predicated region
      $region37: #{tpu_custom_call.1} parent=5 // pred_check
        %p282 = pneg %p281
      $region38: #{tpu_custom_call.1} parent=5 // pred_check_branch
        %284 = sbr.rel (%p282) target = $region40
      $region39: #{tpu_custom_call.1} parent=5 // pred_region
        // Predicated region
        $region41: #{tpu_custom_call.1} parent=39 // pred_check
          %p285 = pneg %p38
        $region42: #{tpu_custom_call.1} parent=39 // pred_check_branch
          %287 = sbr.rel (%p285) target = $region44
        $region43: #{tpu_custom_call.1} parent=39 // pred_region
          %s288 = sand.u32 %s28, 1
          %s289 = sand.u32 %s28, 1
          %s290 = smul.addr %s289, 32
          %s291 = scalar_lea.vmem [#allocation2], %s290
          %s292 = smul.u32 4, %s18
          %s293 = smul.addr %s292, 4
          %s294 = scalar_lea.vmem %s0, %s293
          // Predicated region
          $region45: #{tpu_custom_call.1} parent=43 // pred_check
            _
          $region46: #{tpu_custom_call.1} parent=43 // pred_check_branch
            %296 = sbr.rel (0) target = $region48
          $region47: #{tpu_custom_call.1} parent=43 // pred_region
            // Predicated region
            $region49: #{tpu_custom_call.1} parent=47 // pred_check
              _
            $region50: #{tpu_custom_call.1} parent=47 // pred_check_branch
              %298 = sbr.rel (0) target = $region52
            $region51: #{tpu_custom_call.1} parent=47 // pred_region
              loop: start=0, step=1, limit=1
              $region53: #{tpu_custom_call.1} parent=51 // loop_pre_header
                _
              $region54: #{tpu_custom_call.1} parent=51 // loop_header
                %s300 = sphi 0, %s304
                %p301 = scmp.ge.s32.totalorder %s300, 1
                %s305 = sphi %s294, %s294
                %s306 = sphi %s291, %s291
              $region55: #{tpu_custom_call.1} parent=51 // loop_header_branch
                %303 = sbr.rel (%p301) target = $region59
              $region56: #{tpu_custom_call.1} parent=51 // loop_body
                %v307 = vld [vmem:[%s305] sm:$0xff]
                %308 = vst [vmem:[%s306] sm:$0xff] %v307
                %v309 = vld [vmem:[%s305 + $0x8] sm:$0xff]
                %310 = vst [vmem:[%s306 + $0x8] sm:$0xff] %v309
                %v311 = vld [vmem:[%s305 + $0x20] sm:$0xff]
                %312 = vst [vmem:[%s306 + $0x10] sm:$0xff] %v311
                %v313 = vld [vmem:[%s305 + $0x28] sm:$0xff]
                %314 = vst [vmem:[%s306 + $0x18] sm:$0xff] %v313
              $region57: #{tpu_custom_call.1} parent=51 // loop_footer
                %s304 = sadd.s32 1, %s300
              $region58: #{tpu_custom_call.1} parent=51 // loop_footer_branch
                %299 = sbr.rel target = $region54
              $region59: #{tpu_custom_call.1} parent=51 // loop_exit
                _
            $region52: #{tpu_custom_call.1} parent=47 // pred_fallthru
              _
            // Predicated region
            $region60: #{tpu_custom_call.1} parent=47 // pred_check
              _
            $region61: #{tpu_custom_call.1} parent=47 // pred_check_branch
              %316 = sbr.rel target = $region63
            $region62: #{tpu_custom_call.1} parent=47 // pred_region
              _
            $region63: #{tpu_custom_call.1} parent=47 // pred_fallthru
              _
          $region48: #{tpu_custom_call.1} parent=43 // pred_fallthru
            _
          %317 = vnop
        $region44: #{tpu_custom_call.1} parent=39 // pred_fallthru
          _
        // Predicated region
        $region64: #{tpu_custom_call.1} parent=39 // pred_check
          %p318 = pneg %p190
        $region65: #{tpu_custom_call.1} parent=39 // pred_check_branch
          %320 = sbr.rel (%p318) target = $region67
        $region66: #{tpu_custom_call.1} parent=39 // pred_region
          %s321 = smul.u32 4, %s18
          %p322 = scmp.lt.s32.totalorder %s321, 7
          %s323 = scalar_select %p322, %s321, 7
          %s324 = smul.addr %s323, 8
          %s325 = scalar_lea.vmem %s7, %s324
          %s326 = smul.u32 4, %s18
        $region67: #{tpu_custom_call.1} parent=39 // pred_fallthru
          _
        // Predicated region
        $region68: #{tpu_custom_call.1} parent=39 // pred_check
          %p327 = pneg %p216
        $region69: #{tpu_custom_call.1} parent=39 // pred_check_branch
          %329 = sbr.rel (%p327) target = $region71
        $region70: #{tpu_custom_call.1} parent=39 // pred_region
          %s330 = smul.u32 4, %s18
          %p331 = scmp.lt.s32.totalorder %s330, 7
          %s332 = scalar_select %p331, %s330, 7
          %s333 = scalar_lea.vmem %s8, %s332
          %s334 = smul.u32 4, %s18
        $region71: #{tpu_custom_call.1} parent=39 // pred_fallthru
          _
      $region40: #{tpu_custom_call.1} parent=5 // pred_fallthru
        _
      %p335 = scmp.le.s32.totalorder 1, %s18
      %p336 = scmp.lt.s32.totalorder %s18, 3
      %p337 = pnand %p335, %p336
      %p338 = pneg %p337
      // Predicated region
      $region72: #{tpu_custom_call.1} parent=5 // pred_check
        _
      $region73: #{tpu_custom_call.1} parent=5 // pred_check_branch
        %340 = sbr.rel (%p337) target = $region75
      $region74: #{tpu_custom_call.1} parent=5 // pred_region
        %s341 = ssub.s32 %s18, 1
        %s342 = sand.u32 %s31, 1
        %s343 = sand.u32 %s31, 1
        %s344 = smul.addr %s343, 32
        %s345 = scalar_lea.vmem [#allocation2], %s344
        // Predicated region
        $region76: #{tpu_custom_call.1} parent=74 // pred_check
          %p346 = pneg %p44
        $region77: #{tpu_custom_call.1} parent=74 // pred_check_branch
          %348 = sbr.rel (%p346) target = $region79
        $region78: #{tpu_custom_call.1} parent=74 // pred_region
          _
        $region79: #{tpu_custom_call.1} parent=74 // pred_fallthru
          _
        %s349 = sand.u32 %s31, 1
        %s350 = sand.u32 %s31, 1
        %s351 = smul.addr %s350, 32
        %s352 = scalar_lea.vmem [#allocation2], %s351
        %p353 = pneg %p44
        %p354 = pneg %p41
        %p355 = pneg %p65
        %p356 = pneg %p62
        %p357 = pneg %p86
        %p358 = pneg %p83
        %p359 = pneg %p107
        %p360 = pneg %p104
        %p361 = pneg %p128
        %p362 = pneg %p125
        %p363 = pneg %p149
        %p364 = pneg %p146
        %p365 = pneg %p170
        %p366 = pneg %p167
        %s367 = smul.u32 4, %s23
        %p368 = scmp.lt.s32.totalorder %s367, 7
        %s369 = scalar_select %p368, %s367, 7
        %s370 = smul.addr %s369, 8
        %s371 = scalar_lea.vmem %s7, %s370
        %p372 = pneg %p196
        %p373 = pneg %p193
        %s374 = smul.u32 4, %s23
        %p375 = scmp.lt.s32.totalorder %s374, 7
        %s376 = scalar_select %p375, %s374, 7
        %s377 = scalar_lea.vmem %s8, %s376
        %p378 = pneg %p222
        %p379 = pneg %p219
        %p380 = pneg %p248
        %p381 = pneg %p245
        %s382 = sand.u32 %s235, 1
        %s383 = scalar_lea.sflag [#allocation4], %s382
        %s384 = sand.u32 %s235, 1
        %s385 = smul.addr %s384, 16
        %s386 = scalar_lea.vmem [#allocation3], %s385
        %s387 = smul.u32 4, %s23
        %s388 = smul.u32 4, %s23
        %p389 = scmp.lt.s32.totalorder %s388, 7
        %s390 = scalar_select %p389, %s388, 7
        %s391 = smul.addr %s390, 8
        %s392 = scalar_lea.vmem %s7, %s391
        %s393 = smul.u32 4, %s23
        %s394 = smul.u32 4, %s23
        %p395 = scmp.lt.s32.totalorder %s394, 7
        %s396 = scalar_select %p395, %s394, 7
        %s397 = scalar_lea.vmem %s8, %s396
        %s398 = smul.u32 4, %s23
        %s399 = smul.u32 4, %s23
        %v401 = vld [vmem:[%s345] sm:$0xff]
        %v402 = vld [vmem:[%s345 + $0x8] sm:$0xff]
        %v403 = vld [vmem:[%s345 + $0x10] sm:$0xff]
        %v404 = vld [vmem:[%s345 + $0x18] sm:$0xff]
        %v405 = vld [vmem:[%s1] sm:$0xf]
        %v406 = vld [vmem:[%s1 + $0x4] sm:$0xf]
        %v407 = vld [vmem:[%s1 + $0x8] sm:$0xf]
        %v408 = vld [vmem:[%s1 + $0xc] sm:$0xf]
        %v409 = vld [vmem:[%s1 + $0x10] sm:$0xf]
        %v410 = vld [vmem:[%s1 + $0x14] sm:$0xf]
        %v411 = vld [vmem:[%s1 + $0x18] sm:$0xf]
        %v412 = vld [vmem:[%s1 + $0x1c] sm:$0xf]
        %v413 = vld [vmem:[%s2] sm:$0xff]
        %v414 = vld [vmem:[%s2 + $0x8] sm:$0xff]
        %v415 = vld [vmem:[%s2 + $0x10] sm:$0xff]
        %v416 = vld [vmem:[%s2 + $0x18] sm:$0xff]
        %v417 = vld [vmem:[%s2 + $0x20] sm:$0xff]
        %v418 = vld [vmem:[%s2 + $0x28] sm:$0xff]
        %v419 = vld [vmem:[%s2 + $0x30] sm:$0xff]
        %v420 = vld [vmem:[%s2 + $0x38] sm:$0xff]
        %422 = vset.pattern.permute.xlu0 0
        %423 = vperm.xlu0 %422, %v413
        %v424 = vpop.permute.xlu0 %423
        %427 = vset.pattern.permute.xlu0 0
        %428 = vperm.xlu0 %427, %v414
        %v429 = vpop.permute.xlu0 %428
        %432 = vset.pattern.permute.xlu0 0
        %433 = vperm.xlu0 %432, %v415
        %v434 = vpop.permute.xlu0 %433
        %437 = vset.pattern.permute.xlu0 0
        %438 = vperm.xlu0 %437, %v416
        %v439 = vpop.permute.xlu0 %438
        %442 = vset.pattern.permute.xlu0 0
        %443 = vperm.xlu0 %442, %v417
        %v444 = vpop.permute.xlu0 %443
        %447 = vset.pattern.permute.xlu0 0
        %448 = vperm.xlu0 %447, %v418
        %v449 = vpop.permute.xlu0 %448
        %452 = vset.pattern.permute.xlu0 0
        %453 = vperm.xlu0 %452, %v419
        %v454 = vpop.permute.xlu0 %453
        %457 = vset.pattern.permute.xlu0 0
        %458 = vperm.xlu0 %457, %v420
        %v459 = vpop.permute.xlu0 %458
        %v469 = vunpack.c.l.b16 %v405
        %v470 = vunpack.c.l.b16 %v406
        %v471 = vunpack.c.l.b16 %v407
        %v472 = vunpack.c.l.b16 %v408
        %v473 = vunpack.c.l.b16 %v409
        %v474 = vunpack.c.l.b16 %v410
        %v475 = vunpack.c.l.b16 %v411
        %v476 = vunpack.c.l.b16 %v412
        %v477 = vpack.c.b16 %v470, %v469
        %v478 = vpack.c.b16 %v472, %v471
        %v479 = vpack.c.b16 %v474, %v473
        %v480 = vpack.c.b16 %v476, %v475
        %v485 = vunpack.c.l.b16 %v401
        %v486 = vunpack.c.h.b16 %v401
        %v487 = vunpack.c.l.b16 %v402
        %v488 = vunpack.c.h.b16 %v402
        %v489 = vunpack.c.l.b16 %v403
        %v490 = vunpack.c.h.b16 %v403
        %v491 = vunpack.c.l.b16 %v404
        %v492 = vunpack.c.h.b16 %v404
        %v493 = vpack.c.b16 %v489, %v485
        %v494 = vpack.c.b16 %v490, %v486
        %v495 = vpack.c.b16 %v491, %v487
        %v496 = vpack.c.b16 %v492, %v488
        %vm501 = vcmask 130048
        %v503 = vsel %vm501, %v477, 0
        %v506 = vsel %vm501, %v478, 0
        %v509 = vsel %vm501, %v479, 0
        %v512 = vsel %vm501, %v480, 0
        %514 = vmatprep.subr.bf16.mxu0 %v494
        %515 = vmatpush1.bf16.msra.mxu0 %v493
        %516 = vmatprep.subr.bf16.mxu0 0
        %517 = vmatpush1.bf16.msra.mxu0 0
        %518 = vmatprep.subr.bf16.mxu0 0
        %519 = vmatpush1.bf16.msra.mxu0 0
        %520 = vmatprep.subr.bf16.mxu0 0
        %521 = vmatpush1.bf16.msra.mxu0 0
        %522 = vmatprep.subr.bf16.mxu0 0
        %523 = vmatpush1.bf16.msra.mxu0 0
        %524 = vmatprep.subr.bf16.mxu0 0
        %525 = vmatpush1.bf16.msra.mxu0 0
        %526 = vmatprep.subr.bf16.mxu0 0
        %527 = vmatpush1.bf16.msra.mxu0 0
        %528 = vmatprep.subr.bf16.mxu0 0
        %529 = vmatpush1.bf16.msra.mxu0 0
        %530 = vmatprep.subr.bf16.mxu0 0
        %531 = vmatpush1.bf16.msra.mxu0 0
        %532 = vmatprep.subr.bf16.mxu0 0
        %533 = vmatpush1.bf16.msra.mxu0 0
        %534 = vmatprep.subr.bf16.mxu0 0
        %535 = vmatpush1.bf16.msra.mxu0 0
        %536 = vmatprep.subr.bf16.mxu0 0
        %537 = vmatpush1.bf16.msra.mxu0 0
        %538 = vmatprep.subr.bf16.mxu0 0
        %539 = vmatpush1.bf16.msra.mxu0 0
        %540 = vmatprep.subr.bf16.mxu0 0
        %541 = vmatpush1.bf16.msra.mxu0 0
        %542 = vmatprep.subr.bf16.mxu0 0
        %543 = vmatpush1.bf16.msra.mxu0 0
        %544 = vmatprep.subr.bf16.mxu0 0
        %545 = vmatpush1.bf16.msra.mxu0 0
        %546 = vmatprep.mubr.bf16.mxu0 0
        %547 = vmatmul.mubr.bf16.gmra.mrb[0].mxu0 %v503
        %v548 = vpop.f32.mrb[0].mxu0
        %v549 = vadd.f32 %v424, %v548
        %v550 = vpop.f32.mrb[0].mxu0
        %v551 = vadd.f32 %v424, %v550
        %v552 = vpop.f32.mrb[0].mxu0
        %v553 = vadd.f32 %v429, %v552
        %v554 = vpop.f32.mrb[0].mxu0
        %v555 = vadd.f32 %v429, %v554
        %556 = vmatprep.mubr.bf16.mxu0 0
        %557 = vmatmul.mubr.bf16.gmra.mrb[0].mxu0 %v506
        %v558 = vpop.f32.mrb[0].mxu0
        %v559 = vadd.f32 %v434, %v558
        %v560 = vpop.f32.mrb[0].mxu0
        %v561 = vadd.f32 %v434, %v560
        %v562 = vpop.f32.mrb[0].mxu0
        %v563 = vadd.f32 %v439, %v562
        %v564 = vpop.f32.mrb[0].mxu0
        %v565 = vadd.f32 %v439, %v564
        %566 = vmatprep.mubr.bf16.mxu0 0
        %567 = vmatmul.mubr.bf16.gmra.mrb[0].mxu0 %v509
        %v568 = vpop.f32.mrb[0].mxu0
        %v569 = vadd.f32 %v444, %v568
        %v570 = vpop.f32.mrb[0].mxu0
        %v571 = vadd.f32 %v444, %v570
        %v572 = vpop.f32.mrb[0].mxu0
        %v573 = vadd.f32 %v449, %v572
        %v574 = vpop.f32.mrb[0].mxu0
        %v575 = vadd.f32 %v449, %v574
        %576 = vmatprep.mubr.bf16.mxu0 0
        %577 = vmatmul.mubr.bf16.gmra.mrb[0].mxu0 %v512
        %v578 = vpop.f32.mrb[0].mxu0
        %v579 = vadd.f32 %v454, %v578
        %v580 = vpop.f32.mrb[0].mxu0
        %v581 = vadd.f32 %v454, %v580
        %v582 = vpop.f32.mrb[0].mxu0
        %v583 = vadd.f32 %v459, %v582
        %v584 = vpop.f32.mrb[0].mxu0
        %v585 = vadd.f32 %v459, %v584
        %586 = vdwg.mxu0
        %587 = vmatprep.subr.bf16.mxu0 %v496
        %588 = vmatpush1.bf16.msra.mxu0 %v495
        %589 = vmatprep.subr.bf16.mxu0 0
        %590 = vmatpush1.bf16.msra.mxu0 0
        %591 = vmatprep.subr.bf16.mxu0 0
        %592 = vmatpush1.bf16.msra.mxu0 0
        %593 = vmatprep.subr.bf16.mxu0 0
        %594 = vmatpush1.bf16.msra.mxu0 0
        %595 = vmatprep.subr.bf16.mxu0 0
        %596 = vmatpush1.bf16.msra.mxu0 0
        %597 = vmatprep.subr.bf16.mxu0 0
        %598 = vmatpush1.bf16.msra.mxu0 0
        %599 = vmatprep.subr.bf16.mxu0 0
        %600 = vmatpush1.bf16.msra.mxu0 0
        %601 = vmatprep.subr.bf16.mxu0 0
        %602 = vmatpush1.bf16.msra.mxu0 0
        %603 = vmatprep.subr.bf16.mxu0 0
        %604 = vmatpush1.bf16.msra.mxu0 0
        %605 = vmatprep.subr.bf16.mxu0 0
        %606 = vmatpush1.bf16.msra.mxu0 0
        %607 = vmatprep.subr.bf16.mxu0 0
        %608 = vmatpush1.bf16.msra.mxu0 0
        %609 = vmatprep.subr.bf16.mxu0 0
        %610 = vmatpush1.bf16.msra.mxu0 0
        %611 = vmatprep.subr.bf16.mxu0 0
        %612 = vmatpush1.bf16.msra.mxu0 0
        %613 = vmatprep.subr.bf16.mxu0 0
        %614 = vmatpush1.bf16.msra.mxu0 0
        %615 = vmatprep.subr.bf16.mxu0 0
        %616 = vmatpush1.bf16.msra.mxu0 0
        %617 = vmatprep.subr.bf16.mxu0 0
        %618 = vmatpush1.bf16.msra.mxu0 0
        %619 = vmatprep.mubr.bf16.mxu0 0
        %620 = vmatmul.mubr.bf16.gmra.mrb[0].mxu0 %v503
        %v621 = vpop.f32.mrb[0].mxu0
        %v622 = vadd.f32 %v424, %v621
        %v623 = vpop.f32.mrb[0].mxu0
        %v624 = vadd.f32 %v424, %v623
        %v625 = vpop.f32.mrb[0].mxu0
        %v626 = vadd.f32 %v429, %v625
        %v627 = vpop.f32.mrb[0].mxu0
        %v628 = vadd.f32 %v429, %v627
        %629 = vmatprep.mubr.bf16.mxu0 0
        %630 = vmatmul.mubr.bf16.gmra.mrb[0].mxu0 %v506
        %v631 = vpop.f32.mrb[0].mxu0
        %v632 = vadd.f32 %v434, %v631
        %v633 = vpop.f32.mrb[0].mxu0
        %v634 = vadd.f32 %v434, %v633
        %v635 = vpop.f32.mrb[0].mxu0
        %v636 = vadd.f32 %v439, %v635
        %v637 = vpop.f32.mrb[0].mxu0
        %v638 = vadd.f32 %v439, %v637
        %639 = vmatprep.mubr.bf16.mxu0 0
        %640 = vmatmul.mubr.bf16.gmra.mrb[0].mxu0 %v509
        %v641 = vpop.f32.mrb[0].mxu0
        %v642 = vadd.f32 %v444, %v641
        %v643 = vpop.f32.mrb[0].mxu0
        %v644 = vadd.f32 %v444, %v643
        %v645 = vpop.f32.mrb[0].mxu0
        %v646 = vadd.f32 %v449, %v645
        %v647 = vpop.f32.mrb[0].mxu0
        %v648 = vadd.f32 %v449, %v647
        %649 = vmatprep.mubr.bf16.mxu0 0
        %650 = vmatmul.mubr.bf16.gmra.mrb[0].mxu0 %v512
        %v651 = vpop.f32.mrb[0].mxu0
        %v652 = vadd.f32 %v454, %v651
        %v653 = vpop.f32.mrb[0].mxu0
        %v654 = vadd.f32 %v454, %v653
        %v655 = vpop.f32.mrb[0].mxu0
        %v656 = vadd.f32 %v459, %v655
        %v657 = vpop.f32.mrb[0].mxu0
        %v658 = vadd.f32 %v459, %v657
        %659 = vdwg.mxu0
        %v660 = vtanh.pop %v549
        %v661 = vtanh.pop %v551
        %v662 = vtanh.pop %v622
        %v663 = vtanh.pop %v624
        %v664 = vtanh.pop %v553
        %v665 = vtanh.pop %v555
        %v666 = vtanh.pop %v626
        %v667 = vtanh.pop %v628
        %v668 = vtanh.pop %v559
        %v669 = vtanh.pop %v561
        %v670 = vtanh.pop %v632
        %v671 = vtanh.pop %v634
        %v672 = vtanh.pop %v563
        %v673 = vtanh.pop %v565
        %v674 = vtanh.pop %v636
        %v675 = vtanh.pop %v638
        %v676 = vtanh.pop %v569
        %v677 = vtanh.pop %v571
        %v678 = vtanh.pop %v642
        %v679 = vtanh.pop %v644
        %v680 = vtanh.pop %v573
        %v681 = vtanh.pop %v575
        %v682 = vtanh.pop %v646
        %v683 = vtanh.pop %v648
        %v684 = vtanh.pop %v579
        %v685 = vtanh.pop %v581
        %v686 = vtanh.pop %v652
        %v687 = vtanh.pop %v654
        %v688 = vtanh.pop %v583
        %v689 = vtanh.pop %v585
        %v690 = vtanh.pop %v656
        %v691 = vtanh.pop %v658
        %v692 = vld [vmem:[%s3] sm:$0xf]
        %v693 = vld [vmem:[%s3 + $0x4] sm:$0xf]
        %v694 = vld [vmem:[%s3 + $0x8] sm:$0xf]
        %v695 = vld [vmem:[%s3 + $0xc] sm:$0xf]
        %v696 = vld [vmem:[%s3 + $0x10] sm:$0xf]
        %v697 = vld [vmem:[%s3 + $0x14] sm:$0xf]
        %v698 = vld [vmem:[%s3 + $0x18] sm:$0xf]
        %v699 = vld [vmem:[%s3 + $0x1c] sm:$0xf]
        %v700 = vpack.c.bf16 %v664, %v660
        %v701 = vpack.c.bf16 %v665, %v661
        %v702 = vpack.c.bf16 %v666, %v662
        %v703 = vpack.c.bf16 %v667, %v663
        %v704 = vpack.c.bf16 %v672, %v668
        %v705 = vpack.c.bf16 %v673, %v669
        %v706 = vpack.c.bf16 %v674, %v670
        %v707 = vpack.c.bf16 %v675, %v671
        %v708 = vpack.c.bf16 %v680, %v676
        %v709 = vpack.c.bf16 %v681, %v677
        %v710 = vpack.c.bf16 %v682, %v678
        %v711 = vpack.c.bf16 %v683, %v679
        %v712 = vpack.c.bf16 %v688, %v684
        %v713 = vpack.c.bf16 %v689, %v685
        %v714 = vpack.c.bf16 %v690, %v686
        %v715 = vpack.c.bf16 %v691, %v687
        %v716 = vld [vmem:[%s4] sm:$0xff]
        %v717 = vld [vmem:[%s4 + $0x8] sm:$0xff]
        %v718 = vld [vmem:[%s4 + $0x10] sm:$0xff]
        %v719 = vld [vmem:[%s4 + $0x18] sm:$0xff]
        %v720 = vld [vmem:[%s4 + $0x20] sm:$0xff]
        %v721 = vld [vmem:[%s4 + $0x28] sm:$0xff]
        %v722 = vld [vmem:[%s4 + $0x30] sm:$0xff]
        %v723 = vld [vmem:[%s4 + $0x38] sm:$0xff]
        %725 = vset.pattern.permute.xlu0 0
        %726 = vperm.xlu0 %725, %v716
        %v727 = vpop.permute.xlu0 %726
        %730 = vset.pattern.permute.xlu0 0
        %731 = vperm.xlu0 %730, %v717
        %v732 = vpop.permute.xlu0 %731
        %735 = vset.pattern.permute.xlu0 0
        %736 = vperm.xlu0 %735, %v718
        %v737 = vpop.permute.xlu0 %736
        %740 = vset.pattern.permute.xlu0 0
        %741 = vperm.xlu0 %740, %v719
        %v742 = vpop.permute.xlu0 %741
        %745 = vset.pattern.permute.xlu0 0
        %746 = vperm.xlu0 %745, %v720
        %v747 = vpop.permute.xlu0 %746
        %750 = vset.pattern.permute.xlu0 0
        %751 = vperm.xlu0 %750, %v721
        %v752 = vpop.permute.xlu0 %751
        %755 = vset.pattern.permute.xlu0 0
        %756 = vperm.xlu0 %755, %v722
        %v757 = vpop.permute.xlu0 %756
        %760 = vset.pattern.permute.xlu0 0
        %761 = vperm.xlu0 %760, %v723
        %v762 = vpop.permute.xlu0 %761
        %v772 = vunpack.c.l.b16 %v692
        %v773 = vunpack.c.l.b16 %v693
        %v774 = vunpack.c.l.b16 %v694
        %v775 = vunpack.c.l.b16 %v695
        %v776 = vunpack.c.l.b16 %v696
        %v777 = vunpack.c.l.b16 %v697
        %v778 = vunpack.c.l.b16 %v698
        %v779 = vunpack.c.l.b16 %v699
        %v780 = vpack.c.b16 %v773, %v772
        %v781 = vpack.c.b16 %v775, %v774
        %v782 = vpack.c.b16 %v777, %v776
        %v783 = vpack.c.b16 %v779, %v778
        %vm784 = vcmask 523264
        %v786 = vsel %vm784, %v780, 0
        %v789 = vsel %vm784, %v781, 0
        %v792 = vsel %vm784, %v782, 0
        %v795 = vsel %vm784, %v783, 0
        %797 = vmatprep.subr.bf16.mxu0 %v701
        %798 = vmatpush1.bf16.msra.mxu0 %v700
        %799 = vmatprep.subr.bf16.mxu0 %v705
        %800 = vmatpush1.bf16.msra.mxu0 %v704
        %801 = vmatprep.subr.bf16.mxu0 %v709
        %802 = vmatpush1.bf16.msra.mxu0 %v708
        %803 = vmatprep.subr.bf16.mxu0 %v713
        %804 = vmatpush1.bf16.msra.mxu0 %v712
        %805 = vmatprep.subr.bf16.mxu0 0
        %806 = vmatpush1.bf16.msra.mxu0 0
        %807 = vmatprep.subr.bf16.mxu0 0
        %808 = vmatpush1.bf16.msra.mxu0 0
        %809 = vmatprep.subr.bf16.mxu0 0
        %810 = vmatpush1.bf16.msra.mxu0 0
        %811 = vmatprep.subr.bf16.mxu0 0
        %812 = vmatpush1.bf16.msra.mxu0 0
        %813 = vmatprep.subr.bf16.mxu0 0
        %814 = vmatpush1.bf16.msra.mxu0 0
        %815 = vmatprep.subr.bf16.mxu0 0
        %816 = vmatpush1.bf16.msra.mxu0 0
        %817 = vmatprep.subr.bf16.mxu0 0
        %818 = vmatpush1.bf16.msra.mxu0 0
        %819 = vmatprep.subr.bf16.mxu0 0
        %820 = vmatpush1.bf16.msra.mxu0 0
        %821 = vmatprep.subr.bf16.mxu0 0
        %822 = vmatpush1.bf16.msra.mxu0 0
        %823 = vmatprep.subr.bf16.mxu0 0
        %824 = vmatpush1.bf16.msra.mxu0 0
        %825 = vmatprep.subr.bf16.mxu0 0
        %826 = vmatpush1.bf16.msra.mxu0 0
        %827 = vmatprep.subr.bf16.mxu0 0
        %828 = vmatpush1.bf16.msra.mxu0 0
        %829 = vmatprep.mubr.bf16.mxu0 0
        %830 = vmatmul.mubr.bf16.gmra.mrb[0].mxu0 %v786
        %v831 = vpop.f32.mrb[0].mxu0
        %v832 = vadd.f32 %v727, %v831
        %v833 = vpop.f32.mrb[0].mxu0
        %v834 = vadd.f32 %v727, %v833
        %v835 = vpop.f32.mrb[0].mxu0
        %v836 = vadd.f32 %v732, %v835
        %v837 = vpop.f32.mrb[0].mxu0
        %v838 = vadd.f32 %v732, %v837
        %839 = vmatprep.mubr.bf16.mxu0 0
        %840 = vmatmul.mubr.bf16.gmra.mrb[0].mxu0 %v789
        %v841 = vpop.f32.mrb[0].mxu0
        %v842 = vadd.f32 %v737, %v841
        %v843 = vpop.f32.mrb[0].mxu0
        %v844 = vadd.f32 %v737, %v843
        %v845 = vpop.f32.mrb[0].mxu0
        %v846 = vadd.f32 %v742, %v845
        %v847 = vpop.f32.mrb[0].mxu0
        %v848 = vadd.f32 %v742, %v847
        %849 = vmatprep.mubr.bf16.mxu0 0
        %850 = vmatmul.mubr.bf16.gmra.mrb[0].mxu0 %v792
        %v851 = vpop.f32.mrb[0].mxu0
        %v852 = vadd.f32 %v747, %v851
        %v853 = vpop.f32.mrb[0].mxu0
        %v854 = vadd.f32 %v747, %v853
        %v855 = vpop.f32.mrb[0].mxu0
        %v856 = vadd.f32 %v752, %v855
        %v857 = vpop.f32.mrb[0].mxu0
        %v858 = vadd.f32 %v752, %v857
        %859 = vmatprep.mubr.bf16.mxu0 0
        %860 = vmatmul.mubr.bf16.gmra.mrb[0].mxu0 %v795
        %v861 = vpop.f32.mrb[0].mxu0
        %v862 = vadd.f32 %v757, %v861
        %v863 = vpop.f32.mrb[0].mxu0
        %v864 = vadd.f32 %v757, %v863
        %v865 = vpop.f32.mrb[0].mxu0
        %v866 = vadd.f32 %v762, %v865
        %v867 = vpop.f32.mrb[0].mxu0
        %v868 = vadd.f32 %v762, %v867
        %869 = vdwg.mxu0
        %870 = vmatprep.subr.bf16.mxu0 %v703
        %871 = vmatpush1.bf16.msra.mxu0 %v702
        %872 = vmatprep.subr.bf16.mxu0 %v707
        %873 = vmatpush1.bf16.msra.mxu0 %v706
        %874 = vmatprep.subr.bf16.mxu0 %v711
        %875 = vmatpush1.bf16.msra.mxu0 %v710
        %876 = vmatprep.subr.bf16.mxu0 %v715
        %877 = vmatpush1.bf16.msra.mxu0 %v714
        %878 = vmatprep.subr.bf16.mxu0 0
        %879 = vmatpush1.bf16.msra.mxu0 0
        %880 = vmatprep.subr.bf16.mxu0 0
        %881 = vmatpush1.bf16.msra.mxu0 0
        %882 = vmatprep.subr.bf16.mxu0 0
        %883 = vmatpush1.bf16.msra.mxu0 0
        %884 = vmatprep.subr.bf16.mxu0 0
        %885 = vmatpush1.bf16.msra.mxu0 0
        %886 = vmatprep.subr.bf16.mxu0 0
        %887 = vmatpush1.bf16.msra.mxu0 0
        %888 = vmatprep.subr.bf16.mxu0 0
        %889 = vmatpush1.bf16.msra.mxu0 0
        %890 = vmatprep.subr.bf16.mxu0 0
        %891 = vmatpush1.bf16.msra.mxu0 0
        %892 = vmatprep.subr.bf16.mxu0 0
        %893 = vmatpush1.bf16.msra.mxu0 0
        %894 = vmatprep.subr.bf16.mxu0 0
        %895 = vmatpush1.bf16.msra.mxu0 0
        %896 = vmatprep.subr.bf16.mxu0 0
        %897 = vmatpush1.bf16.msra.mxu0 0
        %898 = vmatprep.subr.bf16.mxu0 0
        %899 = vmatpush1.bf16.msra.mxu0 0
        %900 = vmatprep.subr.bf16.mxu0 0
        %901 = vmatpush1.bf16.msra.mxu0 0
        %902 = vmatprep.mubr.bf16.mxu0 0
        %903 = vmatmul.mubr.bf16.gmra.mrb[0].mxu0 %v786
        %v904 = vpop.f32.mrb[0].mxu0
        %v905 = vadd.f32 %v727, %v904
        %v906 = vpop.f32.mrb[0].mxu0
        %v907 = vadd.f32 %v727, %v906
        %v908 = vpop.f32.mrb[0].mxu0
        %v909 = vadd.f32 %v732, %v908
        %v910 = vpop.f32.mrb[0].mxu0
        %v911 = vadd.f32 %v732, %v910
        %912 = vmatprep.mubr.bf16.mxu0 0
        %913 = vmatmul.mubr.bf16.gmra.mrb[0].mxu0 %v789
        %v914 = vpop.f32.mrb[0].mxu0
        %v915 = vadd.f32 %v737, %v914
        %v916 = vpop.f32.mrb[0].mxu0
        %v917 = vadd.f32 %v737, %v916
        %v918 = vpop.f32.mrb[0].mxu0
        %v919 = vadd.f32 %v742, %v918
        %v920 = vpop.f32.mrb[0].mxu0
        %v921 = vadd.f32 %v742, %v920
        %922 = vmatprep.mubr.bf16.mxu0 0
        %923 = vmatmul.mubr.bf16.gmra.mrb[0].mxu0 %v792
        %v924 = vpop.f32.mrb[0].mxu0
        %v925 = vadd.f32 %v747, %v924
        %v926 = vpop.f32.mrb[0].mxu0
        %v927 = vadd.f32 %v747, %v926
        %v928 = vpop.f32.mrb[0].mxu0
        %v929 = vadd.f32 %v752, %v928
        %v930 = vpop.f32.mrb[0].mxu0
        %v931 = vadd.f32 %v752, %v930
        %932 = vmatprep.mubr.bf16.mxu0 0
        %933 = vmatmul.mubr.bf16.gmra.mrb[0].mxu0 %v795
        %v934 = vpop.f32.mrb[0].mxu0
        %v935 = vadd.f32 %v757, %v934
        %v936 = vpop.f32.mrb[0].mxu0
        %v937 = vadd.f32 %v757, %v936
        %v938 = vpop.f32.mrb[0].mxu0
        %v939 = vadd.f32 %v762, %v938
        %v940 = vpop.f32.mrb[0].mxu0
        %v941 = vadd.f32 %v762, %v940
        %942 = vdwg.mxu0
        %v943 = vtanh.pop %v832
        %v944 = vtanh.pop %v834
        %v945 = vtanh.pop %v905
        %v946 = vtanh.pop %v907
        %v947 = vtanh.pop %v836
        %v948 = vtanh.pop %v838
        %v949 = vtanh.pop %v909
        %v950 = vtanh.pop %v911
        %v951 = vtanh.pop %v842
        %v952 = vtanh.pop %v844
        %v953 = vtanh.pop %v915
        %v954 = vtanh.pop %v917
        %v955 = vtanh.pop %v846
        %v956 = vtanh.pop %v848
        %v957 = vtanh.pop %v919
        %v958 = vtanh.pop %v921
        %v959 = vtanh.pop %v852
        %v960 = vtanh.pop %v854
        %v961 = vtanh.pop %v925
        %v962 = vtanh.pop %v927
        %v963 = vtanh.pop %v856
        %v964 = vtanh.pop %v858
        %v965 = vtanh.pop %v929
        %v966 = vtanh.pop %v931
        %v967 = vtanh.pop %v862
        %v968 = vtanh.pop %v864
        %v969 = vtanh.pop %v935
        %v970 = vtanh.pop %v937
        %v971 = vtanh.pop %v866
        %v972 = vtanh.pop %v868
        %v973 = vtanh.pop %v939
        %v974 = vtanh.pop %v941
        %v975 = vld [vmem:[%s5] sm:$0xff]
        %v976 = vld [vmem:[%s6] sm:$0xff]
        %978 = vset.pattern.permute.xlu0 0
        %979 = vperm.xlu0 %978, %v976
        %v980 = vpop.permute.xlu0 %979
        %v983 = vsel %vm784, %v975, 0
        %985 = vmatprep.subr.mxu0 %v944
        %986 = vmatpush1.msra.mxu0 %v943
        %987 = vmatprep.subr.mxu0 %v948
        %988 = vmatpush1.msra.mxu0 %v947
        %989 = vmatprep.subr.mxu0 %v952
        %990 = vmatpush1.msra.mxu0 %v951
        %991 = vmatprep.subr.mxu0 %v956
        %992 = vmatpush1.msra.mxu0 %v955
        %993 = vmatprep.subr.mxu0 %v960
        %994 = vmatpush1.msra.mxu0 %v959
        %995 = vmatprep.subr.mxu0 %v964
        %996 = vmatpush1.msra.mxu0 %v963
        %997 = vmatprep.subr.mxu0 %v968
        %998 = vmatpush1.msra.mxu0 %v967
        %999 = vmatprep.subr.mxu0 %v972
        %1000 = vmatpush1.msra.mxu0 %v971
        %1001 = vmatprep.subr.mxu0 0.0
        %1002 = vmatpush1.msra.mxu0 0.0
        %1003 = vmatprep.subr.mxu0 0.0
        %1004 = vmatpush1.msra.mxu0 0.0
        %1005 = vmatprep.subr.mxu0 0.0
        %1006 = vmatpush1.msra.mxu0 0.0
        %1007 = vmatprep.subr.mxu0 0.0
        %1008 = vmatpush1.msra.mxu0 0.0
        %1009 = vmatprep.subr.mxu0 0.0
        %1010 = vmatpush1.msra.mxu0 0.0
        %1011 = vmatprep.subr.mxu0 0.0
        %1012 = vmatpush1.msra.mxu0 0.0
        %1013 = vmatprep.subr.mxu0 0.0
        %1014 = vmatpush1.msra.mxu0 0.0
        %1015 = vmatprep.subr.mxu0 0.0
        %1016 = vmatpush1.msra.mxu0 0.0
        %1017 = vmatprep.subr.mxu0 0.0
        %1018 = vmatpush1.msra.mxu0 0.0
        %1019 = vmatprep.subr.mxu0 0.0
        %1020 = vmatpush1.msra.mxu0 0.0
        %1021 = vmatprep.subr.mxu0 0.0
        %1022 = vmatpush1.msra.mxu0 0.0
        %1023 = vmatprep.subr.mxu0 0.0
        %1024 = vmatpush1.msra.mxu0 0.0
        %1025 = vmatprep.subr.mxu0 0.0
        %1026 = vmatpush1.msra.mxu0 0.0
        %1027 = vmatprep.subr.mxu0 0.0
        %1028 = vmatpush1.msra.mxu0 0.0
        %1029 = vmatprep.subr.mxu0 0.0
        %1030 = vmatpush1.msra.mxu0 0.0
        %1031 = vmatprep.subr.mxu0 0.0
        %1032 = vmatpush1.msra.mxu0 0.0
        %1033 = vmatprep.subr.mxu0 0.0
        %1034 = vmatpush1.msra.mxu0 0.0
        %1035 = vmatprep.subr.mxu0 0.0
        %1036 = vmatpush1.msra.mxu0 0.0
        %1037 = vmatprep.subr.mxu0 0.0
        %1038 = vmatpush1.msra.mxu0 0.0
        %1039 = vmatprep.subr.mxu0 0.0
        %1040 = vmatpush1.msra.mxu0 0.0
        %1041 = vmatprep.subr.mxu0 0.0
        %1042 = vmatpush1.msra.mxu0 0.0
        %1043 = vmatprep.subr.mxu0 0.0
        %1044 = vmatpush1.msra.mxu0 0.0
        %1045 = vmatprep.subr.mxu0 0.0
        %1046 = vmatpush1.msra.mxu0 0.0
        %1047 = vmatprep.subr.mxu0 0.0
        %1048 = vmatpush1.msra.mxu0 0.0
        %1049 = vmatprep.mubr.f32.mxu0 0.0
        %1050 = vmatmul.mubr.f32.gmra.mrb[0].mxu0 %v983
        %v1051 = vpop.f32.mrb[0].mxu0
        %v1052 = vadd.f32 %v980, %v1051
        %v1053 = vpop.f32.mrb[0].mxu0
        %v1054 = vadd.f32 %v980, %v1053
        %1055 = vdwg.mxu0
        %1056 = vmatprep.subr.mxu0 %v946
        %1057 = vmatpush1.msra.mxu0 %v945
        %1058 = vmatprep.subr.mxu0 %v950
        %1059 = vmatpush1.msra.mxu0 %v949
        %1060 = vmatprep.subr.mxu0 %v954
        %1061 = vmatpush1.msra.mxu0 %v953
        %1062 = vmatprep.subr.mxu0 %v958
        %1063 = vmatpush1.msra.mxu0 %v957
        %1064 = vmatprep.subr.mxu0 %v962
        %1065 = vmatpush1.msra.mxu0 %v961
        %1066 = vmatprep.subr.mxu0 %v966
        %1067 = vmatpush1.msra.mxu0 %v965
        %1068 = vmatprep.subr.mxu0 %v970
        %1069 = vmatpush1.msra.mxu0 %v969
        %1070 = vmatprep.subr.mxu0 %v974
        %1071 = vmatpush1.msra.mxu0 %v973
        %1072 = vmatprep.subr.mxu0 0.0
        %1073 = vmatpush1.msra.mxu0 0.0
        %1074 = vmatprep.subr.mxu0 0.0
        %1075 = vmatpush1.msra.mxu0 0.0
        %1076 = vmatprep.subr.mxu0 0.0
        %1077 = vmatpush1.msra.mxu0 0.0
        %1078 = vmatprep.subr.mxu0 0.0
        %1079 = vmatpush1.msra.mxu0 0.0
        %1080 = vmatprep.subr.mxu0 0.0
        %1081 = vmatpush1.msra.mxu0 0.0
        %1082 = vmatprep.subr.mxu0 0.0
        %1083 = vmatpush1.msra.mxu0 0.0
        %1084 = vmatprep.subr.mxu0 0.0
        %1085 = vmatpush1.msra.mxu0 0.0
        %1086 = vmatprep.subr.mxu0 0.0
        %1087 = vmatpush1.msra.mxu0 0.0
        %1088 = vmatprep.subr.mxu0 0.0
        %1089 = vmatpush1.msra.mxu0 0.0
        %1090 = vmatprep.subr.mxu0 0.0
        %1091 = vmatpush1.msra.mxu0 0.0
        %1092 = vmatprep.subr.mxu0 0.0
        %1093 = vmatpush1.msra.mxu0 0.0
        %1094 = vmatprep.subr.mxu0 0.0
        %1095 = vmatpush1.msra.mxu0 0.0
        %1096 = vmatprep.subr.mxu0 0.0
        %1097 = vmatpush1.msra.mxu0 0.0
        %1098 = vmatprep.subr.mxu0 0.0
        %1099 = vmatpush1.msra.mxu0 0.0
        %1100 = vmatprep.subr.mxu0 0.0
        %1101 = vmatpush1.msra.mxu0 0.0
        %1102 = vmatprep.subr.mxu0 0.0
        %1103 = vmatpush1.msra.mxu0 0.0
        %1104 = vmatprep.subr.mxu0 0.0
        %1105 = vmatpush1.msra.mxu0 0.0
        %1106 = vmatprep.subr.mxu0 0.0
        %1107 = vmatpush1.msra.mxu0 0.0
        %1108 = vmatprep.subr.mxu0 0.0
        %1109 = vmatpush1.msra.mxu0 0.0
        %1110 = vmatprep.subr.mxu0 0.0
        %1111 = vmatpush1.msra.mxu0 0.0
        %1112 = vmatprep.subr.mxu0 0.0
        %1113 = vmatpush1.msra.mxu0 0.0
        %1114 = vmatprep.subr.mxu0 0.0
        %1115 = vmatpush1.msra.mxu0 0.0
        %1116 = vmatprep.subr.mxu0 0.0
        %1117 = vmatpush1.msra.mxu0 0.0
        %1118 = vmatprep.subr.mxu0 0.0
        %1119 = vmatpush1.msra.mxu0 0.0
        %1120 = vmatprep.mubr.f32.mxu0 0.0
        %1121 = vmatmul.mubr.f32.gmra.mrb[0].mxu0 %v983
        %v1122 = vpop.f32.mrb[0].mxu0
        %v1123 = vadd.f32 %v980, %v1122
        %v1124 = vpop.f32.mrb[0].mxu0
        %v1125 = vadd.f32 %v980, %v1124
        %1126 = vdwg.mxu0
        %v1127 = vrot.slane %v1052, 4
        %v1128 = vmax.f32 %v1052, %v1127
        %v1129 = vrot.slane %v1128, 2
        %v1130 = vmax.f32 %v1128, %v1129
        %v1131 = vrot.slane %v1130, 1
        %v1132 = vmax.f32 %v1130, %v1131
        %v1133 = vrot.slane %v1054, 4
        %v1134 = vmax.f32 %v1054, %v1133
        %v1135 = vrot.slane %v1134, 2
        %v1136 = vmax.f32 %v1134, %v1135
        %v1137 = vrot.slane %v1136, 1
        %v1138 = vmax.f32 %v1136, %v1137
        %v1139 = vrot.slane %v1123, 4
        %v1140 = vmax.f32 %v1123, %v1139
        %v1141 = vrot.slane %v1140, 2
        %v1142 = vmax.f32 %v1140, %v1141
        %v1143 = vrot.slane %v1142, 1
        %v1144 = vmax.f32 %v1142, %v1143
        %v1145 = vrot.slane %v1125, 4
        %v1146 = vmax.f32 %v1125, %v1145
        %v1147 = vrot.slane %v1146, 2
        %v1148 = vmax.f32 %v1146, %v1147
        %v1149 = vrot.slane %v1148, 1
        %v1150 = vmax.f32 %v1148, %v1149
        %v1151 = vsub.f32 %v1052, %v1132
        %v1152 = vsub.f32 %v1054, %v1138
        %v1153 = vsub.f32 %v1123, %v1144
        %v1154 = vsub.f32 %v1125, %v1150
        %v1155 = vmul.f32 %v1151, 1.442695
        %v1156 = vpow.pop %v1155
        %v1157 = vmul.f32 %v1152, 1.442695
        %v1158 = vpow.pop %v1157
        %v1159 = vmul.f32 %v1153, 1.442695
        %v1160 = vpow.pop %v1159
        %v1161 = vmul.f32 %v1154, 1.442695
        %v1162 = vpow.pop %v1161
        %v1163 = vrot.slane %v1156, 4
        %v1164 = vadd.f32 %v1156, %v1163
        %v1165 = vrot.slane %v1164, 2
        %v1166 = vadd.f32 %v1164, %v1165
        %v1167 = vrot.slane %v1166, 1
        %v1168 = vadd.f32 %v1166, %v1167
        %v1169 = vrot.slane %v1158, 4
        %v1170 = vadd.f32 %v1158, %v1169
        %v1171 = vrot.slane %v1170, 2
        %v1172 = vadd.f32 %v1170, %v1171
        %v1173 = vrot.slane %v1172, 1
        %v1174 = vadd.f32 %v1172, %v1173
        %v1175 = vrot.slane %v1160, 4
        %v1176 = vadd.f32 %v1160, %v1175
        %v1177 = vrot.slane %v1176, 2
        %v1178 = vadd.f32 %v1176, %v1177
        %v1179 = vrot.slane %v1178, 1
        %v1180 = vadd.f32 %v1178, %v1179
        %v1181 = vrot.slane %v1162, 4
        %v1182 = vadd.f32 %v1162, %v1181
        %v1183 = vrot.slane %v1182, 2
        %v1184 = vadd.f32 %v1182, %v1183
        %v1185 = vrot.slane %v1184, 1
        %v1186 = vadd.f32 %v1184, %v1185
        %v1187 = vlog2.pop %v1168
        %v1188 = vmul.f32 %v1187, 0.6931472
        %v1189 = vlog2.pop %v1174
        %v1190 = vmul.f32 %v1189, 0.6931472
        %v1191 = vlog2.pop %v1180
        %v1192 = vmul.f32 %v1191, 0.6931472
        %v1193 = vlog2.pop %v1186
        %v1194 = vmul.f32 %v1193, 0.6931472
        %v1195 = vsub.f32 %v1151, %v1188
        %v1196 = vsub.f32 %v1152, %v1190
        %v1197 = vsub.f32 %v1153, %v1192
        %v1198 = vsub.f32 %v1154, %v1194
        %v1199 = vld [vmem:[%s392] sm:$0xff]
        %v1200 = vld [vmem:[%s392 + $0x8] sm:$0xff]
        %v1201 = vld [vmem:[%s392 + $0x10] sm:$0xff]
        %v1202 = vld [vmem:[%s392 + $0x18] sm:$0xff]
        %v1203 = vadd.f32 %v1052, %v1199
        %v1204 = vadd.f32 %v1054, %v1200
        %v1205 = vadd.f32 %v1123, %v1201
        %v1206 = vadd.f32 %v1125, %v1202
        %v1207 = vlaneseq
        %v1208 = vshrl.u32 %v1207, 7
        %v1209 = vrot.slane %v1203, 4
        %v1210 = vmax.f32 %v1203, %v1209
        %v1211 = vrot.slane %v1210, 2
        %v1212 = vmax.f32 %v1210, %v1211
        %v1213 = vrot.slane %v1212, 1
        %v1214 = vmax.f32 %v1212, %v1213
        %v1215 = vrot.slane %v1204, 4
        %v1216 = vmax.f32 %v1204, %v1215
        %v1217 = vrot.slane %v1216, 2
        %v1218 = vmax.f32 %v1216, %v1217
        %v1219 = vrot.slane %v1218, 1
        %v1220 = vmax.f32 %v1218, %v1219
        %v1221 = vrot.slane %v1205, 4
        %v1222 = vmax.f32 %v1205, %v1221
        %v1223 = vrot.slane %v1222, 2
        %v1224 = vmax.f32 %v1222, %v1223
        %v1225 = vrot.slane %v1224, 1
        %v1226 = vmax.f32 %v1224, %v1225
        %v1227 = vrot.slane %v1206, 4
        %v1228 = vmax.f32 %v1206, %v1227
        %v1229 = vrot.slane %v1228, 2
        %v1230 = vmax.f32 %v1228, %v1229
        %v1231 = vrot.slane %v1230, 1
        %v1232 = vmax.f32 %v1230, %v1231
        %vm1233 = vcmp.eq.f32.partialorder %v1203, %v1214
        %vm1234 = vcmp.eq.f32.partialorder %v1204, %v1220
        %vm1235 = vcmp.eq.f32.partialorder %v1205, %v1226
        %vm1236 = vcmp.eq.f32.partialorder %v1206, %v1232
        %v1237 = vsel %vm1233, %v1208, 8
        %v1238 = vsel %vm1234, %v1208, 8
        %v1239 = vsel %vm1235, %v1208, 8
        %v1240 = vsel %vm1236, %v1208, 8
        %v1241 = vrot.slane %v1237, 4
        %vm1242 = vcmp.lt.s32.totalorder %v1237, %v1241
        %v1243 = vsel %vm1242, %v1237, %v1241
        %v1244 = vrot.slane %v1243, 2
        %vm1245 = vcmp.lt.s32.totalorder %v1243, %v1244
        %v1246 = vsel %vm1245, %v1243, %v1244
        %v1247 = vrot.slane %v1246, 1
        %vm1248 = vcmp.lt.s32.totalorder %v1246, %v1247
        %v1249 = vsel %vm1248, %v1246, %v1247
        %v1250 = vrot.slane %v1238, 4
        %vm1251 = vcmp.lt.s32.totalorder %v1238, %v1250
        %v1252 = vsel %vm1251, %v1238, %v1250
        %v1253 = vrot.slane %v1252, 2
        %vm1254 = vcmp.lt.s32.totalorder %v1252, %v1253
        %v1255 = vsel %vm1254, %v1252, %v1253
        %v1256 = vrot.slane %v1255, 1
        %vm1257 = vcmp.lt.s32.totalorder %v1255, %v1256
        %v1258 = vsel %vm1257, %v1255, %v1256
        %v1259 = vrot.slane %v1239, 4
        %vm1260 = vcmp.lt.s32.totalorder %v1239, %v1259
        %v1261 = vsel %vm1260, %v1239, %v1259
        %v1262 = vrot.slane %v1261, 2
        %vm1263 = vcmp.lt.s32.totalorder %v1261, %v1262
        %v1264 = vsel %vm1263, %v1261, %v1262
        %v1265 = vrot.slane %v1264, 1
        %vm1266 = vcmp.lt.s32.totalorder %v1264, %v1265
        %v1267 = vsel %vm1266, %v1264, %v1265
        %v1268 = vrot.slane %v1240, 4
        %vm1269 = vcmp.lt.s32.totalorder %v1240, %v1268
        %v1270 = vsel %vm1269, %v1240, %v1268
        %v1271 = vrot.slane %v1270, 2
        %vm1272 = vcmp.lt.s32.totalorder %v1270, %v1271
        %v1273 = vsel %vm1272, %v1270, %v1271
        %v1274 = vrot.slane %v1273, 1
        %vm1275 = vcmp.lt.s32.totalorder %v1273, %v1274
        %v1276 = vsel %vm1275, %v1273, %v1274
        %vm1277 = vcmp.eq.s32.totalorder %v1208, %v1249
        %vm1278 = vcmp.eq.s32.totalorder %v1208, %v1258
        %vm1279 = vcmp.eq.s32.totalorder %v1208, %v1267
        %vm1280 = vcmp.eq.s32.totalorder %v1208, %v1276
        %v1281 = vsel %vm1277, %v1195, 0.0
        %v1282 = vsel %vm1278, %v1196, 0.0
        %v1283 = vsel %vm1279, %v1197, 0.0
        %v1284 = vsel %vm1280, %v1198, 0.0
        %v1285 = vrot.slane %v1281, 4
        %v1286 = vadd.f32 %v1281, %v1285
        %v1287 = vrot.slane %v1286, 2
        %v1288 = vadd.f32 %v1286, %v1287
        %v1289 = vrot.slane %v1288, 1
        %v1290 = vadd.f32 %v1288, %v1289
        %v1291 = vrot.slane %v1282, 4
        %v1292 = vadd.f32 %v1282, %v1291
        %v1293 = vrot.slane %v1292, 2
        %v1294 = vadd.f32 %v1292, %v1293
        %v1295 = vrot.slane %v1294, 1
        %v1296 = vadd.f32 %v1294, %v1295
        %v1297 = vrot.slane %v1283, 4
        %v1298 = vadd.f32 %v1283, %v1297
        %v1299 = vrot.slane %v1298, 2
        %v1300 = vadd.f32 %v1298, %v1299
        %v1301 = vrot.slane %v1300, 1
        %v1302 = vadd.f32 %v1300, %v1301
        %v1303 = vrot.slane %v1284, 4
        %v1304 = vadd.f32 %v1284, %v1303
        %v1305 = vrot.slane %v1304, 2
        %v1306 = vadd.f32 %v1304, %v1305
        %v1307 = vrot.slane %v1306, 1
        %v1308 = vadd.f32 %v1306, %v1307
        %v1309 = vcvt.s32.f32 %v1249
        %v1310 = vcvt.s32.f32 %v1258
        %v1311 = vcvt.s32.f32 %v1267
        %v1312 = vcvt.s32.f32 %v1276
        %v1317 = vcombine.low %v1309, %v1310
        %v1318 = vcombine.low %v1311, %v1312
        %v1320 = vunpack.c.l.s4 1966171168
        %v1321 = vunpack.c.0.s8 %v1320
        %v1322 = vlaneseq
        %v1323 = vshrl.u32 %v1322, 7
        %v1324 = vsub.s32 %v1321, %v1323
        %v1325 = vrot.slane %v1317, %v1324
        %v1327 = vunpack.c.l.s4 1966171168
        %v1328 = vunpack.c.0.s8 %v1327
        %v1329 = vlaneseq
        %v1330 = vshrl.u32 %v1329, 7
        %v1331 = vsub.s32 %v1328, %v1330
        %v1332 = vrot.slane %v1318, %v1331
        %v1333 = vcombine.low %v1325, %v1332
        %v1335 = vunpack.c.l.s4 1966171168
        %v1336 = vunpack.c.0.s8 %v1335
        %v1337 = vlaneseq
        %v1338 = vshrl.u32 %v1337, 7
        %v1339 = vsub.s32 %v1336, %v1338
        %v1340 = vrot.slane %v1333, %v1339
        %v1342 = vlaneseq
        %vm1343 = vcmp.ge.s32.totalorder %v1342, 0
        %vm1344 = vcmp.lt.s32.totalorder %v1342, 512
        %vm1345 = vmand %vm1343, %vm1344
        %1346 = vst.msk [vmem:[%s386] ss:$4 sm:$0xf] %vm1345, %v1340
        %v1351 = vcombine.low %v1290, %v1296
        %v1352 = vcombine.low %v1302, %v1308
        %v1354 = vunpack.c.l.s4 1966171168
        %v1355 = vunpack.c.0.s8 %v1354
        %v1356 = vlaneseq
        %v1357 = vshrl.u32 %v1356, 7
        %v1358 = vsub.s32 %v1355, %v1357
        %v1359 = vrot.slane %v1351, %v1358
        %v1361 = vunpack.c.l.s4 1966171168
        %v1362 = vunpack.c.0.s8 %v1361
        %v1363 = vlaneseq
        %v1364 = vshrl.u32 %v1363, 7
        %v1365 = vsub.s32 %v1362, %v1364
        %v1366 = vrot.slane %v1352, %v1365
        %v1367 = vcombine.low %v1359, %v1366
        %v1369 = vunpack.c.l.s4 1966171168
        %v1370 = vunpack.c.0.s8 %v1369
        %v1371 = vlaneseq
        %v1372 = vshrl.u32 %v1371, 7
        %v1373 = vsub.s32 %v1370, %v1372
        %v1374 = vrot.slane %v1367, %v1373
        %s1376 = scalar_lea.vmem %s386, 1 [#allocation3]
        %1377 = vst.msk [vmem:[%s1376] ss:$4 sm:$0xf] %vm1345, %v1374
        %v1378 = vld [vmem:[%s397] sm:$0xf]
        %v1379 = vlaneseq
        %v1380 = vshrl.u32 %v1379, 7
        %v1381 = vsub.s32 0, %v1380
        %v1382 = vrot.slane %v1378, %v1381
        %v1383 = vlaneseq
        %v1384 = vshrl.u32 %v1383, 7
        %v1385 = vsub.s32 1, %v1384
        %v1386 = vrot.slane %v1378, %v1385
        %v1387 = vlaneseq
        %v1388 = vshrl.u32 %v1387, 7
        %v1389 = vsub.s32 2, %v1388
        %v1390 = vrot.slane %v1378, %v1389
        %v1391 = vlaneseq
        %v1392 = vshrl.u32 %v1391, 7
        %v1393 = vsub.s32 3, %v1392
        %v1394 = vrot.slane %v1378, %v1393
        %vm1395 = vcmp.eq.s32.totalorder %v1208, %v1382
        %vm1396 = vcmp.eq.s32.totalorder %v1208, %v1386
        %vm1397 = vcmp.eq.s32.totalorder %v1208, %v1390
        %vm1398 = vcmp.eq.s32.totalorder %v1208, %v1394
        %v1399 = vsel %vm1395, %v1195, 0.0
        %v1400 = vsel %vm1396, %v1196, 0.0
        %v1401 = vsel %vm1397, %v1197, 0.0
        %v1402 = vsel %vm1398, %v1198, 0.0
        %v1403 = vrot.slane %v1399, 4
        %v1404 = vadd.f32 %v1399, %v1403
        %v1405 = vrot.slane %v1404, 2
        %v1406 = vadd.f32 %v1404, %v1405
        %v1407 = vrot.slane %v1406, 1
        %v1408 = vadd.f32 %v1406, %v1407
        %v1409 = vrot.slane %v1400, 4
        %v1410 = vadd.f32 %v1400, %v1409
        %v1411 = vrot.slane %v1410, 2
        %v1412 = vadd.f32 %v1410, %v1411
        %v1413 = vrot.slane %v1412, 1
        %v1414 = vadd.f32 %v1412, %v1413
        %v1415 = vrot.slane %v1401, 4
        %v1416 = vadd.f32 %v1401, %v1415
        %v1417 = vrot.slane %v1416, 2
        %v1418 = vadd.f32 %v1416, %v1417
        %v1419 = vrot.slane %v1418, 1
        %v1420 = vadd.f32 %v1418, %v1419
        %v1421 = vrot.slane %v1402, 4
        %v1422 = vadd.f32 %v1402, %v1421
        %v1423 = vrot.slane %v1422, 2
        %v1424 = vadd.f32 %v1422, %v1423
        %v1425 = vrot.slane %v1424, 1
        %v1426 = vadd.f32 %v1424, %v1425
        %v1431 = vcombine.low %v1408, %v1414
        %v1432 = vcombine.low %v1420, %v1426
        %v1434 = vunpack.c.l.s4 1966171168
        %v1435 = vunpack.c.0.s8 %v1434
        %v1436 = vlaneseq
        %v1437 = vshrl.u32 %v1436, 7
        %v1438 = vsub.s32 %v1435, %v1437
        %v1439 = vrot.slane %v1431, %v1438
        %v1441 = vunpack.c.l.s4 1966171168
        %v1442 = vunpack.c.0.s8 %v1441
        %v1443 = vlaneseq
        %v1444 = vshrl.u32 %v1443, 7
        %v1445 = vsub.s32 %v1442, %v1444
        %v1446 = vrot.slane %v1432, %v1445
        %v1447 = vcombine.low %v1439, %v1446
        %v1449 = vunpack.c.l.s4 1966171168
        %v1450 = vunpack.c.0.s8 %v1449
        %v1451 = vlaneseq
        %v1452 = vshrl.u32 %v1451, 7
        %v1453 = vsub.s32 %v1450, %v1452
        %v1454 = vrot.slane %v1447, %v1453
        %s1456 = scalar_lea.vmem %s386, 2 [#allocation3]
        %1457 = vst.msk [vmem:[%s1456] ss:$4 sm:$0xf] %vm1345, %v1454
        %s1458 = sand.u32 %s235, 1
        %s1459 = scalar_lea.sflag [#allocation4], %s1458
        %s1460 = sand.u32 %s235, 1
        %s1461 = smul.addr %s1460, 16
        %s1462 = scalar_lea.vmem [#allocation3], %s1461
        // Predicated region
        $region80: #{tpu_custom_call.1} parent=74 // pred_check
          %p1463 = pneg %p245
        $region81: #{tpu_custom_call.1} parent=74 // pred_check_branch
          %1465 = sbr.rel (%p1463) target = $region83
        $region82: #{tpu_custom_call.1} parent=74 // pred_region
          %s1466 = smul.u32 4, %s23
          %s1468 = ssub.s32 256, 256
          %1469 = vsyncadd %s1459, %s1468
          %s1470 = smul.addr %s1466, 64
          %s1471 = scalar_lea.hbm %s9, %s1470
          %s1473 = sshll.u32 %s1462, 4
          %s1474 = int_to_ptr.vmem [resolvable:$true] %s1473
          %1476 = dma.vmem_to_hbm [thread:$0]  %s1474, 256, %s1471, %s1459
        $region83: #{tpu_custom_call.1} parent=74 // pred_fallthru
          _
      $region75: #{tpu_custom_call.1} parent=5 // pred_fallthru
        _
      %p1477 = scmp.le.s32.totalorder 2, %s18
      // Predicated region
      $region84: #{tpu_custom_call.1} parent=5 // pred_check
        %p1478 = pneg %p1477
      $region85: #{tpu_custom_call.1} parent=5 // pred_check_branch
        %1480 = sbr.rel (%p1478) target = $region87
      $region86: #{tpu_custom_call.1} parent=5 // pred_region
        %s1481 = ssub.s32 %s18, 2
        // Predicated region
        $region88: #{tpu_custom_call.1} parent=86 // pred_check
          %p1482 = pneg %p251
        $region89: #{tpu_custom_call.1} parent=86 // pred_check_branch
          %1484 = sbr.rel (%p1482) target = $region91
        $region90: #{tpu_custom_call.1} parent=86 // pred_region
          %s1485 = sand.u32 %s236, 1
          %s1486 = scalar_lea.sflag [#allocation4], %s1485
          %s1487 = sand.u32 %s236, 1
          %s1488 = smul.addr %s1487, 16
          %s1489 = scalar_lea.vmem [#allocation3], %s1488
          %1490 = dma.done %s1486, 256
        $region91: #{tpu_custom_call.1} parent=86 // pred_fallthru
          _
      $region87: #{tpu_custom_call.1} parent=5 // pred_fallthru
        _
    $region6: #{tpu_custom_call.1} parent=1 // loop_footer
      %s22 = sadd.s32 1, %s18
    $region7: #{tpu_custom_call.1} parent=1 // loop_footer_branch
      %17 = sbr.rel target = $region3
    $region8: #{tpu_custom_call.1} parent=1 // loop_exit
      _
    %1491 = vsyncpa [#allocation4], 1
    %s1492 = scalar_lea.sflag [#allocation4], 1
    %1493 = vsyncpa %s1492, 1

</llo_original>
